<compile_context>
chip_gen: v7x
topology: tpu7x:2x2x1
jax: 0.10.0
libtpu: 0.0.40
codegen_flags: <defaults>
</compile_context>

<pallas_src>
import functools
import math

import jax
import jax.numpy as jnp
from jax import lax
from jax.experimental import pallas as pl
from jax.experimental.pallas import tpu as pltpu


def _round_up(n, m):
    return ((n + m - 1) // m) * m


def _largest_divisor_leq(n, cap):
    cap = max(1, min(n, cap))
    for d in range(cap, 0, -1):
        if n % d == 0:
            return d
    return 1


def _conv3x3_relu_kernel(top_ref, x_ref, bot_ref, w_ref, o_ref, *, h_total):
    # top_ref : (B_T, 1,   W, Cin)   row just above the tile (masked at the border)
    # x_ref   : (B_T, T_H, W, Cin)   the tile itself
    # bot_ref : (B_T, 1,   W, Cin)   row just below the tile (masked at the border)
    # w_ref   : (9*Cin, Cout)        packed weight, K ordered (ky, kx, ci)
    # o_ref   : (B_T, T_H, W*Cout)   lane-dense output block (no channel padding)
    bt, th, w, cin = x_ref.shape
    cout = w_ref.shape[1]
    cdt = x_ref.dtype
    j = pl.program_id(1)

    # Slab with one halo row above / below the tile.
    xs = jnp.concatenate([top_ref[...], x_ref[...], bot_ref[...]], axis=1)

    # Zero every slab row that falls outside the image: top/bottom image borders
    # and, for a ragged last H tile, the garbage rows past h_total.  Single
    # compute-dtype select (no f32 round trip).
    g = j * th - 1 + lax.broadcasted_iota(jnp.int32, (1, th + 2, 1, 1), 1)
    xs = jnp.where((g >= 0) & (g < h_total), xs, jnp.zeros((), cdt))

    # Width taps: input column w-1 / w+1 aligned with output column w (zero col
    # at the left/right image border).
    zc = jnp.zeros((bt, th + 2, 1, cin), cdt)
    left = jnp.concatenate([zc, xs[:, :, : w - 1, :]], axis=2)
    right = jnp.concatenate([xs[:, :, 1:, :], zc], axis=2)
    cols = jnp.concatenate([left, xs, right], axis=3)            # (bt, th+2, W, 3*Cin)

    # Fold the three row taps into K as well -> one K = 9*Cin MXU matmul with
    # value-level f32 accumulation (no VMEM accumulator, no += round trips).
    cols9 = jnp.concatenate(
        [cols[:, 0:th], cols[:, 1:th + 1], cols[:, 2:th + 2]], axis=3)  # (bt, th, W, 9*Cin)
    m = bt * th * w
    acc = jnp.dot(cols9.reshape(m, 9 * cin), w_ref[...],
                  preferred_element_type=jnp.float32)            # (M, Cout) f32
    out = jnp.maximum(acc, 0.0).reshape(bt, th, w, cout)         # ReLU in f32 (VPU)

    # Lane-dense store: merge (W, Cout) onto the lane axis so the block written
    # back is (bt, th, W*Cout) -> wide stores + exactly the useful HBM bytes.
    # (For very wide images this unrolled merge should be replaced by W-tiling.)
    merged = jnp.concatenate([out[:, :, i, :] for i in range(w)], axis=-1)
    o_ref[...] = merged.astype(o_ref.dtype)


def pack_conv3x3_weight(w_oihw, compute_dtype=jnp.bfloat16):
    """(Cout, Cin, 3, 3) PyTorch weight -> (9*Cin, Cout), K ordered (ky, kx, ci)."""
    cout, cin, kh, kw = w_oihw.shape
    assert kh == 3 and kw == 3
    w = jnp.transpose(w_oihw, (2, 3, 1, 0)).reshape(9 * cin, cout)
    return w.astype(compute_dtype)


def _estimate_step_vmem(bt, th, w, cin, cout, out_itemsize):
    """Rough per-grid-step VMEM footprint (double-buffered blocks + in-kernel
    values), including (sublane, lane) padding of narrow minor dims."""
    lane = 128
    in_block = bt * (th + 2) * _round_up(w, 16) * _round_up(cin, lane) * 2   # bf16
    out_block = bt * th * _round_up(w * cout, lane) * out_itemsize
    pix = bt * th * w
    tmps = (pix * _round_up(3 * cin, lane) * 2 * 2        # slab / left / right / cols
            + pix * _round_up(9 * cin, lane) * 2          # cols9
            + pix * _round_up(cout, lane) * 4             # acc / relu
            + bt * th * _round_up(w * cout, lane) * 4)    # merged output value
    weight = _round_up(9 * cin, 16) * _round_up(cout, lane) * 2
    return 2 * (in_block + out_block) + tmps + 2 * weight


def _pick_tile_h(h, max_th):
    """tile_h must be a multiple of 8 or equal to H (output block 2nd-minor rule)."""
    if max_th >= h:
        return h
    best_div, t = 0, 8
    while t <= max_th:
        if h % t == 0:
            best_div = t
        t += 8
    if best_div * 2 > max_th:          # good exact divisor -> no ragged tile
        return best_div
    return min(h, max(8, (max_th // 8) * 8))   # ragged last tile (handled in-kernel)


def conv3x3_relu_pallas(x_nhwc, w_packed, *, tile_h=None, batch_tile=None,
                        compute_dtype=jnp.bfloat16, out_dtype=jnp.float32,
                        target_pixels=4096, vmem_budget_bytes=20 * 1024 * 1024):
    """x_nhwc: (N, H, W, Cin); w_packed: (9*Cin, Cout). Returns (N, H, W, Cout)."""
    n, h, w, cin = x_nhwc.shape
    assert w_packed.shape[0] == 9 * cin
    cout = w_packed.shape[1]
    out_isz = jnp.dtype(out_dtype).itemsize
    auto_bt, auto_th = batch_tile is None, tile_h is None

    def fits(bt, th):
        return _estimate_step_vmem(bt, th, w, cin, cout, out_isz) <= vmem_budget_bytes

    if auto_th:
        max_th = max(1, min(h, target_pixels // max(w, 1)))
        while max_th > 1 and not fits(1, max_th):
            max_th -= 1
        tile_h = _pick_tile_h(h, max_th)
    else:
        tile_h = h if tile_h >= h else min(h, _round_up(max(1, tile_h), 8))
    # TODO(synk): very wide images would additionally need W tiling (column halo
    # via manual make_async_copy); not needed for MergeRes feature-map sizes.

    if auto_bt:
        max_bt = max(1, min(n, target_pixels // max(tile_h * w, 1)))
        while max_bt > 1 and not fits(max_bt, tile_h):
            max_bt -= 1
        batch_tile = _largest_divisor_leq(n, max_bt)
    batch_tile = max(1, min(batch_tile, n))

    # Keep >= 2 grid steps on a parallel axis (megacore / v7x dual-TC).
    if pl.cdiv(n, batch_tile) * pl.cdiv(h, tile_h) < 2:
        if auto_bt and n >= 2:
            batch_tile = _largest_divisor_leq(n, max(1, n // 2))
        elif auto_th and h >= 16:
            tile_h = max(8, ((h // 2) // 8) * 8)

    grid = (pl.cdiv(n, batch_tile), pl.cdiv(h, tile_h))

    x_c = x_nhwc.astype(compute_dtype)
    w_c = w_packed.astype(compute_dtype)

    th = tile_h
    top_map = lambda b, j: (b, jnp.maximum(j * th - 1, 0), 0, 0)
    main_map = lambda b, j: (b, j, 0, 0)
    bot_map = lambda b, j: (b, jnp.minimum((j + 1) * th, h - 1), 0, 0)
    out_map = lambda b, j: (b, j, 0)

    flops = 2 * n * h * w * 9 * cin * cout
    bytes_accessed = (x_c.size * x_c.dtype.itemsize
                      + w_c.size * w_c.dtype.itemsize
                      + n * h * w * cout * out_isz)

    out_flat = pl.pallas_call(
        functools.partial(_conv3x3_relu_kernel, h_total=h),
        out_shape=jax.ShapeDtypeStruct((n, h, w * cout), out_dtype),
        grid_spec=pltpu.PrefetchScalarGridSpec(
            num_scalar_prefetch=0,
            grid=grid,
            in_specs=[
                pl.BlockSpec((batch_tile, 1, w, cin), top_map),
                pl.BlockSpec((batch_tile, tile_h, w, cin), main_map),
                pl.BlockSpec((batch_tile, 1, w, cin), bot_map),
                # Constant index_map -> the (tiny) packed weight stays resident;
                # pl.Buffered(1) would single-buffer it but is skipped for safety.
                pl.BlockSpec((9 * cin, cout), lambda b, j: (0, 0)),
            ],
            out_specs=pl.BlockSpec((batch_tile, tile_h, w * cout), out_map),
        ),
        compiler_params=pltpu.CompilerParams(
            dimension_semantics=("parallel", "parallel"),
            # per-step footprint is budgeted to <= ~20 MiB above, so 48 MiB keeps
            # headroom on v5e/v6e (128 MiB VMEM) and stays inside v7x's 64 MiB.
            vmem_limit_bytes=48 * 1024 * 1024,
        ),
        cost_estimate=pl.CostEstimate(
            flops=flops, transcendentals=0, bytes_accessed=bytes_accessed),
    )(x_c, x_c, x_c, w_c)

    # Free metadata reshape (same HBM layout): (N, H, W*Cout) -> (N, H, W, Cout).
    return out_flat.reshape(n, h, w, cout)


class MergeResPallas:
    """JAX/Pallas equivalent of the PyTorch MergeRes module (NCHW public API)."""

    def __init__(self, in_channels, out_channels, context=False, key=None,
                 compute_dtype=jnp.bfloat16):
        if key is None:
            key = jax.random.PRNGKey(0)
        self.context = context
        self.out_channels = out_channels
        self.compute_dtype = compute_dtype
        # kaiming_normal_(mode='fan_in') on Conv2d(out, in, 3, 3), no bias.
        fan_in = in_channels * 3 * 3
        std = math.sqrt(2.0 / fan_in)
        self.w_oihw = std * jax.random.normal(
            key, (out_channels, in_channels, 3, 3), dtype=jnp.float32)
        self.w_packed = pack_conv3x3_weight(self.w_oihw, compute_dtype)

    def __call__(self, x_nchw, *, tile_h=None, batch_tile=None):
        # Public API matches PyTorch (NCHW).  In an NHWC end-to-end model call
        # conv3x3_relu_pallas directly and drop these two HBM transposes (the
        # biggest remaining byte saving, especially on v5e).
        x_nhwc = jnp.transpose(x_nchw, (0, 2, 3, 1)).astype(self.compute_dtype)
        y_nhwc = conv3x3_relu_pallas(
            x_nhwc, self.w_packed,
            tile_h=tile_h, batch_tile=batch_tile,
            compute_dtype=self.compute_dtype)
        y = jnp.transpose(y_nhwc, (0, 3, 1, 2))
        if self.context:
            feat = y
            return (y, feat)   # PyTorch MergeRes returns the ReLU'd conv output twice
        return y


def _reference(x_nchw, w_oihw):
    x_r = x_nchw.astype(jnp.bfloat16).astype(jnp.float32)
    w_r = w_oihw.astype(jnp.bfloat16).astype(jnp.float32)
    y = lax.conv_general_dilated(
        x_r, w_r, window_strides=(1, 1), padding=((1, 1), (1, 1)),
        dimension_numbers=("NCHW", "OIHW", "NCHW"),
        precision=lax.Precision.HIGHEST)
    return jnp.maximum(y, 0.0)


if __name__ == "__main__":
    key = jax.random.PRNGKey(0)
    k_x, k_w, k_x2 = jax.random.split(key, 3)

    N, Cin, H, W = 2, 4, 16, 16
    Cout = 8

    x = jax.random.normal(k_x, (N, Cin, H, W), dtype=jnp.float32)
    module = MergeResPallas(Cin, Cout, context=False, key=k_w)
    y_ref = _reference(x, module.w_oihw)

    # 1) default (auto) tiling.
    y = jax.block_until_ready(module(x))
    assert y.shape == (N, Cout, H, W)
    assert jnp.allclose(y, y_ref, atol=2e-3, rtol=2e-3)

    # 2) explicit spatial tiling: exercises the cross-tile halo path (grid (2, 2)).
    y_tiled = jax.block_until_ready(module(x, tile_h=8, batch_tile=1))
    assert jnp.allclose(y_tiled, y_ref, atol=2e-3, rtol=2e-3)

    # 3) ragged last H tile (H=12 with tile_h=8): exercises the in-kernel row
    #    validity mask and Pallas' partial-block writeback.
    x2 = jax.random.normal(k_x2, (1, Cin, 12, W), dtype=jnp.float32)
    y2_ref = _reference(x2, module.w_oihw)
    y2 = jax.block_until_ready(module(x2, tile_h=8, batch_tile=1))
    assert y2.shape == (1, Cout, 12, W)
    assert jnp.allclose(y2, y2_ref, atol=2e-3, rtol=2e-3)

    # 4) context=True returns (x, feat) like the PyTorch module.
    module_ctx = MergeResPallas(Cin, Cout, context=True, key=k_w)
    y_ctx, feat = module_ctx(x)
    jax.block_until_ready(y_ctx)
    assert jnp.allclose(y_ctx, y_ref, atol=2e-3, rtol=2e-3)
    assert feat.shape == y_ctx.shape

    print("KERNEL_OK")
</pallas_src>

<mosaic_0001>
module attributes {stable_mosaic.version = 11 : i64} {
  func.func @_conv3x3_relu_kernel(%arg0: i32, %arg1: i32, %arg2: memref<1x1x16x4xbf16, #tpu.memory_space<vmem>>, %arg3: memref<1x16x16x4xbf16, #tpu.memory_space<vmem>>, %arg4: memref<1x1x16x4xbf16, #tpu.memory_space<vmem>>, %arg5: memref<36x8xbf16, #tpu.memory_space<vmem>>, %arg6: memref<1x16x128xf32, #tpu.memory_space<vmem>>) attributes {dimension_semantics = [#tpu.dimension_semantics<parallel>, #tpu.dimension_semantics<parallel>], iteration_bounds = array<i64: 2, 1>, scalar_prefetch = 0 : i64, scratch_operands = 0 : i64, tpu.core_type = #tpu.core_type<tc>, window_params = [{transform_indices = @transform_0, window_bounds = array<i64: 1, 1, 16, 4>}, {transform_indices = @transform_1, window_bounds = array<i64: 1, 16, 16, 4>}, {transform_indices = @transform_2, window_bounds = array<i64: 1, 1, 16, 4>}, {pipeline_mode = #tpu.pipeline_mode<synchronous>, transform_indices = @transform_3, window_bounds = array<i64: 36, 8>}, {transform_indices = @transform_4, window_bounds = array<i64: 1, 16, 128>}]} {
    %c0 = arith.constant 0 : index
    %c0_0 = arith.constant 0 : index
    %c0_1 = arith.constant 0 : index
    %c0_2 = arith.constant 0 : index
    %0 = vector.load %arg2[%c0, %c0_0, %c0_1, %c0_2] : memref<1x1x16x4xbf16, #tpu.memory_space<vmem>>, vector<1x1x16x4xbf16>
    %c0_3 = arith.constant 0 : index
    %c0_4 = arith.constant 0 : index
    %c0_5 = arith.constant 0 : index
    %c0_6 = arith.constant 0 : index
    %1 = vector.load %arg3[%c0_3, %c0_4, %c0_5, %c0_6] : memref<1x16x16x4xbf16, #tpu.memory_space<vmem>>, vector<1x16x16x4xbf16>
    %c0_7 = arith.constant 0 : index
    %c0_8 = arith.constant 0 : index
    %c0_9 = arith.constant 0 : index
    %c0_10 = arith.constant 0 : index
    %2 = vector.load %arg4[%c0_7, %c0_8, %c0_9, %c0_10] : memref<1x1x16x4xbf16, #tpu.memory_space<vmem>>, vector<1x1x16x4xbf16>
    %3 = tpu.concatenate %0, %1, %2 in 1 : vector<1x1x16x4xbf16>, vector<1x16x16x4xbf16>, vector<1x1x16x4xbf16> -> vector<1x18x16x4xbf16>
    %c16_i32 = arith.constant 16 : i32
    %4 = arith.muli %arg1, %c16_i32 : i32
    %c1_i32 = arith.constant 1 : i32
    %5 = arith.subi %4, %c1_i32 : i32
    %6 = tpu.iota {dimensions = array<i32: 1>} : vector<1x18x1x1xi32>
    %7 = vector.broadcast %5 : i32 to vector<1x18x1x1xi32>
    %8 = arith.addi %7, %6 : vector<1x18x1x1xi32>
    %c0_i32 = arith.constant 0 : i32
    %9 = vector.broadcast %c0_i32 : i32 to vector<1x18x1x1xi32>
    %10 = arith.cmpi sge, %8, %9 : vector<1x18x1x1xi32>
    %c16_i32_11 = arith.constant 16 : i32
    %11 = vector.broadcast %c16_i32_11 : i32 to vector<1x18x1x1xi32>
    %12 = arith.cmpi slt, %8, %11 : vector<1x18x1x1xi32>
    %13 = arith.andi %10, %12 : vector<1x18x1x1xi1>
    %cst = arith.constant 0.000000e+00 : bf16
    %14 = vector.shape_cast %13 : vector<1x18x1x1xi1> to vector<1x18x1x1xi1>
    %15 = vector.broadcast %14 : vector<1x18x1x1xi1> to vector<1x18x16x4xi1>
    %16 = vector.broadcast %cst : bf16 to vector<1x18x16x4xbf16>
    %17 = arith.select %15, %3, %16 : vector<1x18x16x4xi1>, vector<1x18x16x4xbf16>
    %cst_12 = arith.constant 0.000000e+00 : bf16
    %18 = vector.broadcast %cst_12 : bf16 to vector<1x18x1x4xbf16>
    %19 = vector.extract_strided_slice %17 {offsets = [0, 0, 0, 0], sizes = [1, 18, 15, 4], strides = [1, 1, 1, 1]} : vector<1x18x16x4xbf16> to vector<1x18x15x4xbf16>
    %20 = tpu.concatenate %18, %19 in 2 : vector<1x18x1x4xbf16>, vector<1x18x15x4xbf16> -> vector<1x18x16x4xbf16>
    %21 = vector.extract_strided_slice %17 {offsets = [0, 0, 1, 0], sizes = [1, 18, 15, 4], strides = [1, 1, 1, 1]} : vector<1x18x16x4xbf16> to vector<1x18x15x4xbf16>
    %22 = tpu.concatenate %21, %18 in 2 : vector<1x18x15x4xbf16>, vector<1x18x1x4xbf16> -> vector<1x18x16x4xbf16>
    %23 = tpu.concatenate %20, %17, %22 in 3 : vector<1x18x16x4xbf16>, vector<1x18x16x4xbf16>, vector<1x18x16x4xbf16> -> vector<1x18x16x12xbf16>
    %24 = vector.extract_strided_slice %23 {offsets = [0, 0, 0, 0], sizes = [1, 16, 16, 12], strides = [1, 1, 1, 1]} : vector<1x18x16x12xbf16> to vector<1x16x16x12xbf16>
    %25 = vector.extract_strided_slice %23 {offsets = [0, 1, 0, 0], sizes = [1, 16, 16, 12], strides = [1, 1, 1, 1]} : vector<1x18x16x12xbf16> to vector<1x16x16x12xbf16>
    %26 = vector.extract_strided_slice %23 {offsets = [0, 2, 0, 0], sizes = [1, 16, 16, 12], strides = [1, 1, 1, 1]} : vector<1x18x16x12xbf16> to vector<1x16x16x12xbf16>
    %27 = tpu.concatenate %24, %25, %26 in 3 : vector<1x16x16x12xbf16>, vector<1x16x16x12xbf16>, vector<1x16x16x12xbf16> -> vector<1x16x16x36xbf16>
    %28 = vector.shape_cast %27 : vector<1x16x16x36xbf16> to vector<256x36xbf16>
    %c0_13 = arith.constant 0 : index
    %c0_14 = arith.constant 0 : index
    %29 = vector.load %arg5[%c0_13, %c0_14] : memref<36x8xbf16, #tpu.memory_space<vmem>>, vector<36x8xbf16>
    %cst_15 = arith.constant dense<0.000000e+00> : vector<256x8xf32>
    %30 = tpu.matmul %28, %29, %cst_15 {dimension_numbers = #tpu.dot_dimension_numbers<[1], [0], [0], [1], [0, 0, 1, 1], [], []>} : vector<256x36xbf16>, vector<36x8xbf16>, vector<256x8xf32> -> vector<256x8xf32>
    %cst_16 = arith.constant 0.000000e+00 : f32
    %31 = vector.broadcast %cst_16 : f32 to vector<256x8xf32>
    %32 = arith.maximumf %30, %31 : vector<256x8xf32>
    %33 = vector.shape_cast %32 : vector<256x8xf32> to vector<1x16x16x8xf32>
    %34 = vector.extract_strided_slice %33 {offsets = [0, 0, 0, 0], sizes = [1, 16, 1, 8], strides = [1, 1, 1, 1]} : vector<1x16x16x8xf32> to vector<1x16x1x8xf32>
    %35 = vector.shape_cast %34 : vector<1x16x1x8xf32> to vector<1x16x8xf32>
    %36 = vector.extract_strided_slice %33 {offsets = [0, 0, 1, 0], sizes = [1, 16, 1, 8], strides = [1, 1, 1, 1]} : vector<1x16x16x8xf32> to vector<1x16x1x8xf32>
    %37 = vector.shape_cast %36 : vector<1x16x1x8xf32> to vector<1x16x8xf32>
    %38 = vector.extract_strided_slice %33 {offsets = [0, 0, 2, 0], sizes = [1, 16, 1, 8], strides = [1, 1, 1, 1]} : vector<1x16x16x8xf32> to vector<1x16x1x8xf32>
    %39 = vector.shape_cast %38 : vector<1x16x1x8xf32> to vector<1x16x8xf32>
    %40 = vector.extract_strided_slice %33 {offsets = [0, 0, 3, 0], sizes = [1, 16, 1, 8], strides = [1, 1, 1, 1]} : vector<1x16x16x8xf32> to vector<1x16x1x8xf32>
    %41 = vector.shape_cast %40 : vector<1x16x1x8xf32> to vector<1x16x8xf32>
    %42 = vector.extract_strided_slice %33 {offsets = [0, 0, 4, 0], sizes = [1, 16, 1, 8], strides = [1, 1, 1, 1]} : vector<1x16x16x8xf32> to vector<1x16x1x8xf32>
    %43 = vector.shape_cast %42 : vector<1x16x1x8xf32> to vector<1x16x8xf32>
    %44 = vector.extract_strided_slice %33 {offsets = [0, 0, 5, 0], sizes = [1, 16, 1, 8], strides = [1, 1, 1, 1]} : vector<1x16x16x8xf32> to vector<1x16x1x8xf32>
    %45 = vector.shape_cast %44 : vector<1x16x1x8xf32> to vector<1x16x8xf32>
    %46 = vector.extract_strided_slice %33 {offsets = [0, 0, 6, 0], sizes = [1, 16, 1, 8], strides = [1, 1, 1, 1]} : vector<1x16x16x8xf32> to vector<1x16x1x8xf32>
    %47 = vector.shape_cast %46 : vector<1x16x1x8xf32> to vector<1x16x8xf32>
    %48 = vector.extract_strided_slice %33 {offsets = [0, 0, 7, 0], sizes = [1, 16, 1, 8], strides = [1, 1, 1, 1]} : vector<1x16x16x8xf32> to vector<1x16x1x8xf32>
    %49 = vector.shape_cast %48 : vector<1x16x1x8xf32> to vector<1x16x8xf32>
    %50 = vector.extract_strided_slice %33 {offsets = [0, 0, 8, 0], sizes = [1, 16, 1, 8], strides = [1, 1, 1, 1]} : vector<1x16x16x8xf32> to vector<1x16x1x8xf32>
    %51 = vector.shape_cast %50 : vector<1x16x1x8xf32> to vector<1x16x8xf32>
    %52 = vector.extract_strided_slice %33 {offsets = [0, 0, 9, 0], sizes = [1, 16, 1, 8], strides = [1, 1, 1, 1]} : vector<1x16x16x8xf32> to vector<1x16x1x8xf32>
    %53 = vector.shape_cast %52 : vector<1x16x1x8xf32> to vector<1x16x8xf32>
    %54 = vector.extract_strided_slice %33 {offsets = [0, 0, 10, 0], sizes = [1, 16, 1, 8], strides = [1, 1, 1, 1]} : vector<1x16x16x8xf32> to vector<1x16x1x8xf32>
    %55 = vector.shape_cast %54 : vector<1x16x1x8xf32> to vector<1x16x8xf32>
    %56 = vector.extract_strided_slice %33 {offsets = [0, 0, 11, 0], sizes = [1, 16, 1, 8], strides = [1, 1, 1, 1]} : vector<1x16x16x8xf32> to vector<1x16x1x8xf32>
    %57 = vector.shape_cast %56 : vector<1x16x1x8xf32> to vector<1x16x8xf32>
    %58 = vector.extract_strided_slice %33 {offsets = [0, 0, 12, 0], sizes = [1, 16, 1, 8], strides = [1, 1, 1, 1]} : vector<1x16x16x8xf32> to vector<1x16x1x8xf32>
    %59 = vector.shape_cast %58 : vector<1x16x1x8xf32> to vector<1x16x8xf32>
    %60 = vector.extract_strided_slice %33 {offsets = [0, 0, 13, 0], sizes = [1, 16, 1, 8], strides = [1, 1, 1, 1]} : vector<1x16x16x8xf32> to vector<1x16x1x8xf32>
    %61 = vector.shape_cast %60 : vector<1x16x1x8xf32> to vector<1x16x8xf32>
    %62 = vector.extract_strided_slice %33 {offsets = [0, 0, 14, 0], sizes = [1, 16, 1, 8], strides = [1, 1, 1, 1]} : vector<1x16x16x8xf32> to vector<1x16x1x8xf32>
    %63 = vector.shape_cast %62 : vector<1x16x1x8xf32> to vector<1x16x8xf32>
    %64 = vector.extract_strided_slice %33 {offsets = [0, 0, 15, 0], sizes = [1, 16, 1, 8], strides = [1, 1, 1, 1]} : vector<1x16x16x8xf32> to vector<1x16x1x8xf32>
    %65 = vector.shape_cast %64 : vector<1x16x1x8xf32> to vector<1x16x8xf32>
    %66 = tpu.concatenate %35, %37, %39, %41, %43, %45, %47, %49, %51, %53, %55, %57, %59, %61, %63, %65 in 2 : vector<1x16x8xf32>, vector<1x16x8xf32>, vector<1x16x8xf32>, vector<1x16x8xf32>, vector<1x16x8xf32>, vector<1x16x8xf32>, vector<1x16x8xf32>, vector<1x16x8xf32>, vector<1x16x8xf32>, vector<1x16x8xf32>, vector<1x16x8xf32>, vector<1x16x8xf32>, vector<1x16x8xf32>, vector<1x16x8xf32>, vector<1x16x8xf32>, vector<1x16x8xf32> -> vector<1x16x128xf32>
    %c0_17 = arith.constant 0 : index
    %c0_18 = arith.constant 0 : index
    %c0_19 = arith.constant 0 : index
    %67 = vector.load %arg6[%c0_17, %c0_18, %c0_19] : memref<1x16x128xf32, #tpu.memory_space<vmem>>, vector<1x16x128xf32>
    tpu.vector_store %arg6[%c0_17, %c0_18, %c0_19], %66 {strides = array<i32>} : memref<1x16x128xf32, #tpu.memory_space<vmem>>, vector<1x16x128xf32>,
    return
  }
  func.func @transform_0(%arg0: i32, %arg1: i32) -> (i32, i32, i32, i32) {
    %c16_i32 = arith.constant 16 : i32
    %0 = arith.muli %arg1, %c16_i32 : i32
    %c1_i32 = arith.constant 1 : i32
    %1 = arith.subi %0, %c1_i32 : i32
    %c0_i32 = arith.constant 0 : i32
    %2 = arith.maxsi %1, %c0_i32 : i32
    %c0_i32_0 = arith.constant 0 : i32
    %c0_i32_1 = arith.constant 0 : i32
    %c0_i32_2 = arith.constant 0 : i32
    return %arg0, %2, %c0_i32_0, %c0_i32_1 : i32, i32, i32, i32
  }
  func.func @transform_1(%arg0: i32, %arg1: i32) -> (i32, i32, i32, i32) {
    %c0_i32 = arith.constant 0 : i32
    %c0_i32_0 = arith.constant 0 : i32
    %c0_i32_1 = arith.constant 0 : i32
    return %arg0, %arg1, %c0_i32, %c0_i32_0 : i32, i32, i32, i32
  }
  func.func @transform_2(%arg0: i32, %arg1: i32) -> (i32, i32, i32, i32) {
    %c1_i32 = arith.constant 1 : i32
    %0 = arith.addi %arg1, %c1_i32 : i32
    %c16_i32 = arith.constant 16 : i32
    %1 = arith.muli %0, %c16_i32 : i32
    %c15_i32 = arith.constant 15 : i32
    %2 = arith.minsi %1, %c15_i32 : i32
    %c0_i32 = arith.constant 0 : i32
    %c0_i32_0 = arith.constant 0 : i32
    %c0_i32_1 = arith.constant 0 : i32
    return %arg0, %2, %c0_i32, %c0_i32_0 : i32, i32, i32, i32
  }
  func.func @transform_3(%arg0: i32, %arg1: i32) -> (i32, i32) {
    %c0_i32 = arith.constant 0 : i32
    %c0_i32_0 = arith.constant 0 : i32
    %c0_i32_1 = arith.constant 0 : i32
    return %c0_i32, %c0_i32_0 : i32, i32
  }
  func.func @transform_4(%arg0: i32, %arg1: i32) -> (i32, i32, i32) {
    %c0_i32 = arith.constant 0 : i32
    %c0_i32_0 = arith.constant 0 : i32
    return %arg0, %arg1, %c0_i32 : i32, i32, i32
  }
}

</mosaic_0001>

<llo_original>
// kernel: tpu_custom_call.1
$region0: #{tpu_custom_call.1}
  #allocation0 [shape = 'u32[]', space=smem, size = 0x4, offset = 0x4, fixed_abs, tag = 'smem constant byte address 0x4 - core index']
  #allocation1 [shape = 'u32[144,128]{1,0:T(1,128)}', space=vmem, size = 0x12000, scoped, tag = 'internal scratch']
  %s0 = inlined_call_operand.vmem [shape: bf16[2,16,16,4], index: 0, kind: input, shape index: {}]
  %s1 = inlined_call_operand.vmem [shape: bf16[2,16,16,4], index: 1, kind: input, shape index: {}]
  %s2 = inlined_call_operand.vmem [shape: bf16[2,16,16,4], index: 2, kind: input, shape index: {}]
  %s3 = inlined_call_operand.vmem [shape: bf16[36,8], index: 3, kind: input, shape index: {}]
  %s4 = inlined_call_operand.hbm [shape: f32[2,16,128], index: 4, kind: output, shape index: {}]
  %s5 = sld [smem:[#allocation0]]
  $region49: #{tpu_custom_call.1} parent=0
    _
  %s7 = ssub.s32 1, %s5
  %s8 = scalar_select 0, %s7, %s5
  $region1: #{tpu_custom_call.1} parent=0
    #allocation2 [shape = 'u8[16384]{0}', space=vmem, size = 0x4000, scoped, tag = 'output window, operand 0']
    #allocation3 [shape = 's32[2]{0}', space=sflag, size = 0x8, scoped, tag = 'scoped memory for tpu_custom_call.1']
    %9 = vsyncpa [#allocation3], 0
    %s10 = scalar_lea.sflag [#allocation3], 1
    %11 = vsyncpa %s10, 0
    loop: start=0, step=1, limit=4
    $region2: #{tpu_custom_call.1} parent=1 // loop_pre_header
      _
    $region3: #{tpu_custom_call.1} parent=1 // loop_header
      %s13 = sphi 0, %s17
      %p14 = scmp.ge.s32.totalorder %s13, 4
      %s20 = sphi 0, %s32
      %s21 = sphi 0, %s28
      %s22 = sphi 0, %s20
      %s23 = sphi 0, %s21
      %s24 = sphi 0, %s22
      %s25 = sphi 0, %s23
      %s45 = sphi 0, %s47
      %s48 = sphi 0, %s45
      %s49 = sphi 0, %s48
      %s65 = sphi 0, %s49
      %s73 = sphi 0, %s75
      %s76 = sphi 0, %s73
      %s77 = sphi 0, %s76
      %s93 = sphi 0, %s77
      %s109 = sphi 0, %s111
      %s112 = sphi 0, %s109
      %s113 = sphi 0, %s112
      %s129 = sphi 0, %s113
      %s133 = sphi 0, %s133
      %s135 = sphi 0, %s133
      %s136 = sphi 0, %s135
      %s150 = sphi 0, %s136
      %s158 = sphi 0, %s160
      %s161 = sphi 0, %s158
      %s162 = sphi 0, %s161
      %s178 = sphi 0, %s162
    $region4: #{tpu_custom_call.1} parent=1 // loop_header_branch
      %16 = sbr.rel (%p14) target = $region8
    $region5: #{tpu_custom_call.1} parent=1 // loop_body
      %s18 = ssub.s32 %s13, 1
      %s19 = ssub.s32 %s13, 2
      %s26 = sadd.s32 1, %s21
      %p27 = scmp.ge.s32.totalorder %s26, 1
      %s28 = scalar_select %p27, 0, %s26
      %s29 = sadd.s32 1, %s20
      %s30 = scalar_select %p27, %s29, %s20
      %p31 = scmp.ge.s32.totalorder %s30, 2
      %s32 = scalar_select %p31, 0, %s30
      %s33 = smul.u32 %s21, 16
      %s34 = ssub.s32 %s33, 1
      %p35 = scmp.gt.s32.totalorder %s34, 0
      %s36 = scalar_select %p35, %s34, 0
      %s37 = smul.u32 %s28, 16
      %s38 = ssub.s32 %s37, 1
      %p39 = scmp.gt.s32.totalorder %s38, 0
      %s40 = scalar_select %p39, %s38, 0
      %s41 = ssub.s32 %s20, %s32
      %s42 = ssub.s32 %s36, %s40
      %s43 = sor.u32 %s41, %s42
      %p44 = scmp.eq.s32.totalorder %s43, 0
      %s46 = sadd.s32 %s45, 1
      %s47 = scalar_select %p44, %s45, %s46
      %p50 = pneg %p44
      %p51 = scmp.eq.s32.totalorder %s13, 1
      %p52 = por %p50, %p51
      %p53 = scmp.ne.s32.totalorder %s45, %s48
      %p54 = scmp.eq.s32.totalorder %s13, 0
      %p55 = por %p53, %p54
      %p56 = scmp.ne.s32.totalorder %s45, %s48
      %p57 = scmp.eq.s32.totalorder %s18, 1
      %p58 = por %p56, %p57
      %p59 = scmp.ne.s32.totalorder %s48, %s49
      %p60 = scmp.eq.s32.totalorder %s18, 0
      %p61 = por %p59, %p60
      %p62 = scmp.ne.s32.totalorder %s48, %s49
      %p63 = scmp.eq.s32.totalorder %s19, 1
      %p64 = por %p62, %p63
      %p66 = scmp.ne.s32.totalorder %s49, %s65
      %p67 = scmp.eq.s32.totalorder %s19, 0
      %p68 = por %p66, %p67
      %s69 = ssub.s32 %s20, %s32
      %s70 = ssub.s32 %s21, %s28
      %s71 = sor.u32 %s69, %s70
      %p72 = scmp.eq.s32.totalorder %s71, 0
      %s74 = sadd.s32 %s73, 1
      %s75 = scalar_select %p72, %s73, %s74
      %p78 = pneg %p72
      %p79 = scmp.eq.s32.totalorder %s13, 1
      %p80 = por %p78, %p79
      %p81 = scmp.ne.s32.totalorder %s73, %s76
      %p82 = scmp.eq.s32.totalorder %s13, 0
      %p83 = por %p81, %p82
      %p84 = scmp.ne.s32.totalorder %s73, %s76
      %p85 = scmp.eq.s32.totalorder %s18, 1
      %p86 = por %p84, %p85
      %p87 = scmp.ne.s32.totalorder %s76, %s77
      %p88 = scmp.eq.s32.totalorder %s18, 0
      %p89 = por %p87, %p88
      %p90 = scmp.ne.s32.totalorder %s76, %s77
      %p91 = scmp.eq.s32.totalorder %s19, 1
      %p92 = por %p90, %p91
      %p94 = scmp.ne.s32.totalorder %s77, %s93
      %p95 = scmp.eq.s32.totalorder %s19, 0
      %p96 = por %p94, %p95
      %s97 = sadd.s32 %s21, 1
      %s98 = smul.u32 %s97, 16
      %p99 = scmp.lt.s32.totalorder %s98, 15
      %s100 = scalar_select %p99, %s98, 15
      %s101 = sadd.s32 %s28, 1
      %s102 = smul.u32 %s101, 16
      %p103 = scmp.lt.s32.totalorder %s102, 15
      %s104 = scalar_select %p103, %s102, 15
      %s105 = ssub.s32 %s20, %s32
      %s106 = ssub.s32 %s100, %s104
      %s107 = sor.u32 %s105, %s106
      %p108 = scmp.eq.s32.totalorder %s107, 0
      %s110 = sadd.s32 %s109, 1
      %s111 = scalar_select %p108, %s109, %s110
      %p114 = pneg %p108
      %p115 = scmp.eq.s32.totalorder %s13, 1
      %p116 = por %p114, %p115
      %p117 = scmp.ne.s32.totalorder %s109, %s112
      %p118 = scmp.eq.s32.totalorder %s13, 0
      %p119 = por %p117, %p118
      %p120 = scmp.ne.s32.totalorder %s109, %s112
      %p121 = scmp.eq.s32.totalorder %s18, 1
      %p122 = por %p120, %p121
      %p123 = scmp.ne.s32.totalorder %s112, %s113
      %p124 = scmp.eq.s32.totalorder %s18, 0
      %p125 = por %p123, %p124
      %p126 = scmp.ne.s32.totalorder %s112, %s113
      %p127 = scmp.eq.s32.totalorder %s19, 1
      %p128 = por %p126, %p127
      %p130 = scmp.ne.s32.totalorder %s113, %s129
      %p131 = scmp.eq.s32.totalorder %s19, 0
      %p132 = por %p130, %p131
      %s134 = sadd.s32 %s133, 1
      %p137 = scmp.eq.s32.totalorder %s13, 1
      %p138 = scmp.ne.s32.totalorder %s133, %s135
      %p139 = scmp.eq.s32.totalorder %s13, 0
      %p140 = por %p138, %p139
      %p141 = scmp.ne.s32.totalorder %s133, %s135
      %p142 = scmp.eq.s32.totalorder %s18, 1
      %p143 = por %p141, %p142
      %p144 = scmp.ne.s32.totalorder %s135, %s136
      %p145 = scmp.eq.s32.totalorder %s18, 0
      %p146 = por %p144, %p145
      %p147 = scmp.ne.s32.totalorder %s135, %s136
      %p148 = scmp.eq.s32.totalorder %s19, 1
      %p149 = por %p147, %p148
      %p151 = scmp.ne.s32.totalorder %s136, %s150
      %p152 = scmp.eq.s32.totalorder %s19, 0
      %p153 = por %p151, %p152
      %s154 = ssub.s32 %s20, %s32
      %s155 = ssub.s32 %s21, %s28
      %s156 = sor.u32 %s154, %s155
      %p157 = scmp.eq.s32.totalorder %s156, 0
      %s159 = sadd.s32 %s158, 1
      %s160 = scalar_select %p157, %s158, %s159
      %p163 = pneg %p157
      %p164 = scmp.eq.s32.totalorder %s13, 1
      %p165 = por %p163, %p164
      %p166 = scmp.ne.s32.totalorder %s158, %s161
      %p167 = scmp.eq.s32.totalorder %s13, 0
      %p168 = por %p166, %p167
      %p169 = scmp.ne.s32.totalorder %s158, %s161
      %p170 = scmp.eq.s32.totalorder %s18, 1
      %p171 = por %p169, %p170
      %p172 = scmp.ne.s32.totalorder %s161, %s162
      %p173 = scmp.eq.s32.totalorder %s18, 0
      %p174 = por %p172, %p173
      %p175 = scmp.ne.s32.totalorder %s161, %s162
      %p176 = scmp.eq.s32.totalorder %s19, 1
      %p177 = por %p175, %p176
      %p179 = scmp.ne.s32.totalorder %s162, %s178
      %p180 = scmp.eq.s32.totalorder %s19, 0
      %p181 = por %p179, %p180
      %p182 = scmp.le.s32.totalorder 1, %s13
      %p183 = scmp.lt.s32.totalorder %s13, 3
      %p184 = pnand %p182, %p183
      %p185 = pneg %p184
      // Predicated region
      $region9: #{tpu_custom_call.1} parent=5 // pred_check
        _
      $region10: #{tpu_custom_call.1} parent=5 // pred_check_branch
        %187 = sbr.rel (%p184) target = $region12
      $region11: #{tpu_custom_call.1} parent=5 // pred_region
        %s188 = ssub.s32 %s13, 1
        // Predicated region
        $region13: #{tpu_custom_call.1} parent=11 // pred_check
          %p189 = pneg %p146
        $region14: #{tpu_custom_call.1} parent=11 // pred_check_branch
          %191 = sbr.rel (%p189) target = $region16
        $region15: #{tpu_custom_call.1} parent=11 // pred_region
          _
        $region16: #{tpu_custom_call.1} parent=11 // pred_fallthru
          _
      $region12: #{tpu_custom_call.1} parent=5 // pred_fallthru
        _
      %p192 = scmp.lt.s32.totalorder %s13, 2
      // Predicated region
      $region17: #{tpu_custom_call.1} parent=5 // pred_check
        %p193 = pneg %p192
      $region18: #{tpu_custom_call.1} parent=5 // pred_check_branch
        %195 = sbr.rel (%p193) target = $region20
      $region19: #{tpu_custom_call.1} parent=5 // pred_region
        // Predicated region
        $region21: #{tpu_custom_call.1} parent=19 // pred_check
          %p196 = pneg %p55
        $region22: #{tpu_custom_call.1} parent=19 // pred_check_branch
          %198 = sbr.rel (%p196) target = $region24
        $region23: #{tpu_custom_call.1} parent=19 // pred_region
          %s199 = smul.u32 %s21, 16
          %s200 = ssub.s32 %s199, 1
          %p201 = scmp.gt.s32.totalorder %s200, 0
          %s202 = scalar_select %p201, %s200, 0
          %p203 = scmp.lt.s32.totalorder %s20, 1
          %s204 = scalar_select %p203, %s20, 1
          %p205 = scmp.lt.s32.totalorder %s202, 15
          %s206 = scalar_select %p205, %s202, 15
          %s207 = smul.addr %s206, 2
          %s208 = smul.addr %s204, 32
          %s209 = sadd.s32 %s207, %s208
          %s210 = smul.addr %s209, 4
          %s211 = scalar_lea.vmem %s0, %s210
          %s212 = smul.u32 %s21, 16
          %s213 = ssub.s32 %s212, 1
          %p214 = scmp.gt.s32.totalorder %s213, 0
          %s215 = scalar_select %p214, %s213, 0
        $region24: #{tpu_custom_call.1} parent=19 // pred_fallthru
          _
        // Predicated region
        $region25: #{tpu_custom_call.1} parent=19 // pred_check
          %p216 = pneg %p83
        $region26: #{tpu_custom_call.1} parent=19 // pred_check_branch
          %218 = sbr.rel (%p216) target = $region28
        $region27: #{tpu_custom_call.1} parent=19 // pred_region
          %s219 = smul.u32 16, %s21
          %p220 = scmp.lt.s32.totalorder %s20, 1
          %s221 = scalar_select %p220, %s20, 1
          %p222 = scmp.lt.s32.totalorder %s219, 15
          %s223 = scalar_select %p222, %s219, 15
          %s224 = smul.addr %s223, 2
          %s225 = smul.addr %s221, 32
          %s226 = sadd.s32 %s224, %s225
          %s227 = smul.addr %s226, 4
          %s228 = scalar_lea.vmem %s1, %s227
          %s229 = smul.u32 16, %s21
        $region28: #{tpu_custom_call.1} parent=19 // pred_fallthru
          _
        // Predicated region
        $region29: #{tpu_custom_call.1} parent=19 // pred_check
          %p230 = pneg %p119
        $region30: #{tpu_custom_call.1} parent=19 // pred_check_branch
          %232 = sbr.rel (%p230) target = $region32
        $region31: #{tpu_custom_call.1} parent=19 // pred_region
          %s233 = sadd.s32 %s21, 1
          %s234 = smul.u32 %s233, 16
          %p235 = scmp.lt.s32.totalorder %s234, 15
          %s236 = scalar_select %p235, %s234, 15
          %p237 = scmp.lt.s32.totalorder %s20, 1
          %s238 = scalar_select %p237, %s20, 1
          %p239 = scmp.lt.s32.totalorder %s236, 15
          %s240 = scalar_select %p239, %s236, 15
          %s241 = smul.addr %s240, 2
          %s242 = smul.addr %s238, 32
          %s243 = sadd.s32 %s241, %s242
          %s244 = smul.addr %s243, 4
          %s245 = scalar_lea.vmem %s2, %s244
          %s246 = sadd.s32 %s21, 1
          %s247 = smul.u32 %s246, 16
          %p248 = scmp.lt.s32.totalorder %s247, 15
          %s249 = scalar_select %p248, %s247, 15
        $region32: #{tpu_custom_call.1} parent=19 // pred_fallthru
          _
      $region20: #{tpu_custom_call.1} parent=5 // pred_fallthru
        _
      %p250 = scmp.le.s32.totalorder 1, %s13
      %p251 = scmp.lt.s32.totalorder %s13, 3
      %p252 = pnand %p250, %p251
      %p253 = pneg %p252
      // Predicated region
      $region33: #{tpu_custom_call.1} parent=5 // pred_check
        _
      $region34: #{tpu_custom_call.1} parent=5 // pred_check_branch
        %255 = sbr.rel (%p252) target = $region36
      $region35: #{tpu_custom_call.1} parent=5 // pred_region
        %s256 = ssub.s32 %s13, 1
        %s257 = smul.u32 %s23, 16
        %s258 = ssub.s32 %s257, 1
        %p259 = scmp.gt.s32.totalorder %s258, 0
        %s260 = scalar_select %p259, %s258, 0
        %p261 = scmp.lt.s32.totalorder %s22, 1
        %s262 = scalar_select %p261, %s22, 1
        %p263 = scmp.lt.s32.totalorder %s260, 15
        %s264 = scalar_select %p263, %s260, 15
        %s265 = smul.addr %s264, 2
        %s266 = smul.addr %s262, 32
        %s267 = sadd.s32 %s265, %s266
        %s268 = smul.addr %s267, 4
        %s269 = scalar_lea.vmem %s0, %s268
        %p270 = pneg %p61
        %p271 = pneg %p58
        %s272 = smul.u32 16, %s23
        %p273 = scmp.lt.s32.totalorder %s22, 1
        %s274 = scalar_select %p273, %s22, 1
        %p275 = scmp.lt.s32.totalorder %s272, 15
        %s276 = scalar_select %p275, %s272, 15
        %s277 = smul.addr %s276, 2
        %s278 = smul.addr %s274, 32
        %s279 = sadd.s32 %s277, %s278
        %s280 = smul.addr %s279, 4
        %s281 = scalar_lea.vmem %s1, %s280
        %p282 = pneg %p89
        %p283 = pneg %p86
        %s284 = sadd.s32 %s23, 1
        %s285 = smul.u32 %s284, 16
        %p286 = scmp.lt.s32.totalorder %s285, 15
        %s287 = scalar_select %p286, %s285, 15
        %p288 = scmp.lt.s32.totalorder %s22, 1
        %s289 = scalar_select %p288, %s22, 1
        %p290 = scmp.lt.s32.totalorder %s287, 15
        %s291 = scalar_select %p290, %s287, 15
        %s292 = smul.addr %s291, 2
        %s293 = smul.addr %s289, 32
        %s294 = sadd.s32 %s292, %s293
        %s295 = smul.addr %s294, 4
        %s296 = scalar_lea.vmem %s2, %s295
        %p297 = pneg %p125
        %p298 = pneg %p122
        %p299 = pneg %p146
        %p300 = pneg %p143
        %p301 = pneg %p174
        %p302 = pneg %p171
        %s303 = sand.u32 %s161, 1
        %s304 = scalar_lea.sflag [#allocation3], %s303
        %s305 = sand.u32 %s161, 1
        %s306 = smul.addr %s305, 16
        %s307 = scalar_lea.vmem [#allocation2], %s306
        %s308 = smul.u32 %s23, 16
        %s309 = ssub.s32 %s308, 1
        %p310 = scmp.gt.s32.totalorder %s309, 0
        %s311 = scalar_select %p310, %s309, 0
        %p312 = scmp.lt.s32.totalorder %s22, 1
        %s313 = scalar_select %p312, %s22, 1
        %p314 = scmp.lt.s32.totalorder %s311, 15
        %s315 = scalar_select %p314, %s311, 15
        %s316 = smul.addr %s315, 2
        %s317 = smul.addr %s313, 32
        %s318 = sadd.s32 %s316, %s317
        %s319 = smul.addr %s318, 4
        %s320 = scalar_lea.vmem %s0, %s319
        %s321 = smul.u32 %s23, 16
        %s322 = ssub.s32 %s321, 1
        %p323 = scmp.gt.s32.totalorder %s322, 0
        %s324 = scalar_select %p323, %s322, 0
        %s325 = smul.u32 16, %s23
        %p326 = scmp.lt.s32.totalorder %s22, 1
        %s327 = scalar_select %p326, %s22, 1
        %p328 = scmp.lt.s32.totalorder %s325, 15
        %s329 = scalar_select %p328, %s325, 15
        %s330 = smul.addr %s329, 2
        %s331 = smul.addr %s327, 32
        %s332 = sadd.s32 %s330, %s331
        %s333 = smul.addr %s332, 4
        %s334 = scalar_lea.vmem %s1, %s333
        %s335 = smul.u32 16, %s23
        %s336 = sadd.s32 %s23, 1
        %s337 = smul.u32 %s336, 16
        %p338 = scmp.lt.s32.totalorder %s337, 15
        %s339 = scalar_select %p338, %s337, 15
        %p340 = scmp.lt.s32.totalorder %s22, 1
        %s341 = scalar_select %p340, %s22, 1
        %p342 = scmp.lt.s32.totalorder %s339, 15
        %s343 = scalar_select %p342, %s339, 15
        %s344 = smul.addr %s343, 2
        %s345 = smul.addr %s341, 32
        %s346 = sadd.s32 %s344, %s345
        %s347 = smul.addr %s346, 4
        %s348 = scalar_lea.vmem %s2, %s347
        %s349 = sadd.s32 %s23, 1
        %s350 = smul.u32 %s349, 16
        %p351 = scmp.lt.s32.totalorder %s350, 15
        %s352 = scalar_select %p351, %s350, 15
        %s353 = smul.u32 2, %s23
        %v355 = vld [vmem:[%s320] sm:$0xf]
        %v356 = vld [vmem:[%s320 + $0x4] sm:$0xf]
        %v357 = vld [vmem:[%s334] sm:$0xf]
        %v358 = vld [vmem:[%s334 + $0x4] sm:$0xf]
        %v359 = vld [vmem:[%s334 + $0x8] sm:$0xf]
        %v360 = vld [vmem:[%s334 + $0xc] sm:$0xf]
        %v361 = vld [vmem:[%s334 + $0x10] sm:$0xf]
        %v362 = vld [vmem:[%s334 + $0x14] sm:$0xf]
        %v363 = vld [vmem:[%s334 + $0x18] sm:$0xf]
        %v364 = vld [vmem:[%s334 + $0x1c] sm:$0xf]
        %v365 = vld [vmem:[%s334 + $0x20] sm:$0xf]
        %v366 = vld [vmem:[%s334 + $0x24] sm:$0xf]
        %v367 = vld [vmem:[%s334 + $0x28] sm:$0xf]
        %v368 = vld [vmem:[%s334 + $0x2c] sm:$0xf]
        %v369 = vld [vmem:[%s334 + $0x30] sm:$0xf]
        %v370 = vld [vmem:[%s334 + $0x34] sm:$0xf]
        %v371 = vld [vmem:[%s334 + $0x38] sm:$0xf]
        %v372 = vld [vmem:[%s334 + $0x3c] sm:$0xf]
        %v373 = vld [vmem:[%s334 + $0x40] sm:$0xf]
        %v374 = vld [vmem:[%s334 + $0x44] sm:$0xf]
        %v375 = vld [vmem:[%s334 + $0x48] sm:$0xf]
        %v376 = vld [vmem:[%s334 + $0x4c] sm:$0xf]
        %v377 = vld [vmem:[%s334 + $0x50] sm:$0xf]
        %v378 = vld [vmem:[%s334 + $0x54] sm:$0xf]
        %v379 = vld [vmem:[%s334 + $0x58] sm:$0xf]
        %v380 = vld [vmem:[%s334 + $0x5c] sm:$0xf]
        %v381 = vld [vmem:[%s334 + $0x60] sm:$0xf]
        %v382 = vld [vmem:[%s334 + $0x64] sm:$0xf]
        %v383 = vld [vmem:[%s334 + $0x68] sm:$0xf]
        %v384 = vld [vmem:[%s334 + $0x6c] sm:$0xf]
        %v385 = vld [vmem:[%s334 + $0x70] sm:$0xf]
        %v386 = vld [vmem:[%s334 + $0x74] sm:$0xf]
        %v387 = vld [vmem:[%s334 + $0x78] sm:$0xf]
        %v388 = vld [vmem:[%s334 + $0x7c] sm:$0xf]
        %v389 = vld [vmem:[%s348] sm:$0xf]
        %v390 = vld [vmem:[%s348 + $0x4] sm:$0xf]
        %s391 = smul.u32 %s23, 16
        %s392 = ssub.s32 %s391, 1
        %v393 = vstv %s392
        %v394 = vadd.s32 %v393, 1
        %v395 = vadd.s32 %v393, 2
        %v396 = vadd.s32 %v393, 3
        %v397 = vadd.s32 %v393, 4
        %v398 = vadd.s32 %v393, 5
        %v399 = vadd.s32 %v393, 6
        %v400 = vadd.s32 %v393, 7
        %v401 = vadd.s32 %v393, 8
        %v402 = vadd.s32 %v393, 9
        %v403 = vadd.s32 %v393, 10
        %v404 = vadd.s32 %v393, 11
        %v405 = vadd.s32 %v393, 12
        %v406 = vadd.s32 %v393, 13
        %v407 = vadd.s32 %v393, 14
        %v408 = vadd.s32 %v393, 15
        %v409 = vadd.s32 %v393, 16
        %v410 = vadd.s32 %v393, 17
        %vm411 = vcmp.ge.s32.totalorder %v393, 0
        %vm412 = vcmp.ge.s32.totalorder %v394, 0
        %vm413 = vcmp.ge.s32.totalorder %v395, 0
        %vm414 = vcmp.ge.s32.totalorder %v396, 0
        %vm415 = vcmp.ge.s32.totalorder %v397, 0
        %vm416 = vcmp.ge.s32.totalorder %v398, 0
        %vm417 = vcmp.ge.s32.totalorder %v399, 0
        %vm418 = vcmp.ge.s32.totalorder %v400, 0
        %vm419 = vcmp.ge.s32.totalorder %v401, 0
        %vm420 = vcmp.ge.s32.totalorder %v402, 0
        %vm421 = vcmp.ge.s32.totalorder %v403, 0
        %vm422 = vcmp.ge.s32.totalorder %v404, 0
        %vm423 = vcmp.ge.s32.totalorder %v405, 0
        %vm424 = vcmp.ge.s32.totalorder %v406, 0
        %vm425 = vcmp.ge.s32.totalorder %v407, 0
        %vm426 = vcmp.ge.s32.totalorder %v408, 0
        %vm427 = vcmp.ge.s32.totalorder %v409, 0
        %vm428 = vcmp.ge.s32.totalorder %v410, 0
        %vm429 = vcmp.lt.s32.totalorder %v393, 16
        %vm430 = vcmp.lt.s32.totalorder %v394, 16
        %vm431 = vcmp.lt.s32.totalorder %v395, 16
        %vm432 = vcmp.lt.s32.totalorder %v396, 16
        %vm433 = vcmp.lt.s32.totalorder %v397, 16
        %vm434 = vcmp.lt.s32.totalorder %v398, 16
        %vm435 = vcmp.lt.s32.totalorder %v399, 16
        %vm436 = vcmp.lt.s32.totalorder %v400, 16
        %vm437 = vcmp.lt.s32.totalorder %v401, 16
        %vm438 = vcmp.lt.s32.totalorder %v402, 16
        %vm439 = vcmp.lt.s32.totalorder %v403, 16
        %vm440 = vcmp.lt.s32.totalorder %v404, 16
        %vm441 = vcmp.lt.s32.totalorder %v405, 16
        %vm442 = vcmp.lt.s32.totalorder %v406, 16
        %vm443 = vcmp.lt.s32.totalorder %v407, 16
        %vm444 = vcmp.lt.s32.totalorder %v408, 16
        %vm445 = vcmp.lt.s32.totalorder %v409, 16
        %vm446 = vcmp.lt.s32.totalorder %v410, 16
        %vm447 = vmand %vm411, %vm429
        %vm448 = vmand %vm412, %vm430
        %vm449 = vmand %vm413, %vm431
        %vm450 = vmand %vm414, %vm432
        %vm451 = vmand %vm415, %vm433
        %vm452 = vmand %vm416, %vm434
        %vm453 = vmand %vm417, %vm435
        %vm454 = vmand %vm418, %vm436
        %vm455 = vmand %vm419, %vm437
        %vm456 = vmand %vm420, %vm438
        %vm457 = vmand %vm421, %vm439
        %vm458 = vmand %vm422, %vm440
        %vm459 = vmand %vm423, %vm441
        %vm460 = vmand %vm424, %vm442
        %vm461 = vmand %vm425, %vm443
        %vm462 = vmand %vm426, %vm444
        %vm463 = vmand %vm427, %vm445
        %vm464 = vmand %vm428, %vm446
        %v465 = vsel %vm447, 1, 0
        %v466 = vsel %vm448, 1, 0
        %v467 = vsel %vm449, 1, 0
        %v468 = vsel %vm450, 1, 0
        %v469 = vsel %vm451, 1, 0
        %v470 = vsel %vm452, 1, 0
        %v471 = vsel %vm453, 1, 0
        %v472 = vsel %vm454, 1, 0
        %v473 = vsel %vm455, 1, 0
        %v474 = vsel %vm456, 1, 0
        %v475 = vsel %vm457, 1, 0
        %v476 = vsel %vm458, 1, 0
        %v477 = vsel %vm459, 1, 0
        %v478 = vsel %vm460, 1, 0
        %v479 = vsel %vm461, 1, 0
        %v480 = vsel %vm462, 1, 0
        %v481 = vsel %vm463, 1, 0
        %v482 = vsel %vm464, 1, 0
        %vm483 = vcmp.eq.s32.totalorder %v465, 1
        %vm484 = vcmp.eq.s32.totalorder %v466, 1
        %vm485 = vcmp.eq.s32.totalorder %v467, 1
        %vm486 = vcmp.eq.s32.totalorder %v468, 1
        %vm487 = vcmp.eq.s32.totalorder %v469, 1
        %vm488 = vcmp.eq.s32.totalorder %v470, 1
        %vm489 = vcmp.eq.s32.totalorder %v471, 1
        %vm490 = vcmp.eq.s32.totalorder %v472, 1
        %vm491 = vcmp.eq.s32.totalorder %v473, 1
        %vm492 = vcmp.eq.s32.totalorder %v474, 1
        %vm493 = vcmp.eq.s32.totalorder %v475, 1
        %vm494 = vcmp.eq.s32.totalorder %v476, 1
        %vm495 = vcmp.eq.s32.totalorder %v477, 1
        %vm496 = vcmp.eq.s32.totalorder %v478, 1
        %vm497 = vcmp.eq.s32.totalorder %v479, 1
        %vm498 = vcmp.eq.s32.totalorder %v480, 1
        %vm499 = vcmp.eq.s32.totalorder %v481, 1
        %vm500 = vcmp.eq.s32.totalorder %v482, 1
        %v501 = vsel %vm483, %v355, 0
        %v502 = vsel %vm483, %v356, 0
        %v503 = vsel %vm484, %v357, 0
        %v504 = vsel %vm484, %v358, 0
        %v505 = vsel %vm485, %v359, 0
        %v506 = vsel %vm485, %v360, 0
        %v507 = vsel %vm486, %v361, 0
        %v508 = vsel %vm486, %v362, 0
        %v509 = vsel %vm487, %v363, 0
        %v510 = vsel %vm487, %v364, 0
        %v511 = vsel %vm488, %v365, 0
        %v512 = vsel %vm488, %v366, 0
        %v513 = vsel %vm489, %v367, 0
        %v514 = vsel %vm489, %v368, 0
        %v515 = vsel %vm490, %v369, 0
        %v516 = vsel %vm490, %v370, 0
        %v517 = vsel %vm491, %v371, 0
        %v518 = vsel %vm491, %v372, 0
        %v519 = vsel %vm492, %v373, 0
        %v520 = vsel %vm492, %v374, 0
        %v521 = vsel %vm493, %v375, 0
        %v522 = vsel %vm493, %v376, 0
        %v523 = vsel %vm494, %v377, 0
        %v524 = vsel %vm494, %v378, 0
        %v525 = vsel %vm495, %v379, 0
        %v526 = vsel %vm495, %v380, 0
        %v527 = vsel %vm496, %v381, 0
        %v528 = vsel %vm496, %v382, 0
        %v529 = vsel %vm497, %v383, 0
        %v530 = vsel %vm497, %v384, 0
        %v531 = vsel %vm498, %v385, 0
        %v532 = vsel %vm498, %v386, 0
        %v533 = vsel %vm499, %v387, 0
        %v534 = vsel %vm499, %v388, 0
        %v535 = vsel %vm500, %v389, 0
        %v536 = vsel %vm500, %v390, 0
        %v573 = vunpack.c.l.b16 %v501
        %v574 = vunpack.c.l.b16 %v502
        %v575 = vunpack.c.l.b16 %v503
        %v576 = vunpack.c.l.b16 %v504
        %v577 = vunpack.c.l.b16 %v505
        %v578 = vunpack.c.l.b16 %v506
        %v579 = vunpack.c.l.b16 %v507
        %v580 = vunpack.c.l.b16 %v508
        %v581 = vunpack.c.l.b16 %v509
        %v582 = vunpack.c.l.b16 %v510
        %v583 = vunpack.c.l.b16 %v511
        %v584 = vunpack.c.l.b16 %v512
        %v585 = vunpack.c.l.b16 %v513
        %v586 = vunpack.c.l.b16 %v514
        %v587 = vunpack.c.l.b16 %v515
        %v588 = vunpack.c.l.b16 %v516
        %v589 = vunpack.c.l.b16 %v517
        %v590 = vunpack.c.l.b16 %v518
        %v591 = vunpack.c.l.b16 %v519
        %v592 = vunpack.c.l.b16 %v520
        %v593 = vunpack.c.l.b16 %v521
        %v594 = vunpack.c.l.b16 %v522
        %v595 = vunpack.c.l.b16 %v523
        %v596 = vunpack.c.l.b16 %v524
        %v597 = vunpack.c.l.b16 %v525
        %v598 = vunpack.c.l.b16 %v526
        %v599 = vunpack.c.l.b16 %v527
        %v600 = vunpack.c.l.b16 %v528
        %v601 = vunpack.c.l.b16 %v529
        %v602 = vunpack.c.l.b16 %v530
        %v603 = vunpack.c.l.b16 %v531
        %v604 = vunpack.c.l.b16 %v532
        %v605 = vunpack.c.l.b16 %v533
        %v606 = vunpack.c.l.b16 %v534
        %v607 = vunpack.c.l.b16 %v535
        %v608 = vunpack.c.l.b16 %v536
        %v609 = vpack.c.b16 %v574, %v573
        %v610 = vpack.c.b16 %v576, %v575
        %v611 = vpack.c.b16 %v578, %v577
        %v612 = vpack.c.b16 %v580, %v579
        %v613 = vpack.c.b16 %v582, %v581
        %v614 = vpack.c.b16 %v584, %v583
        %v615 = vpack.c.b16 %v586, %v585
        %v616 = vpack.c.b16 %v588, %v587
        %v617 = vpack.c.b16 %v590, %v589
        %v618 = vpack.c.b16 %v592, %v591
        %v619 = vpack.c.b16 %v594, %v593
        %v620 = vpack.c.b16 %v596, %v595
        %v621 = vpack.c.b16 %v598, %v597
        %v622 = vpack.c.b16 %v600, %v599
        %v623 = vpack.c.b16 %v602, %v601
        %v624 = vpack.c.b16 %v604, %v603
        %v625 = vpack.c.b16 %v606, %v605
        %v626 = vpack.c.b16 %v608, %v607
        %v628 = vshrl.u32 %v609, 16
        %v630 = vrot.slane %v628, 7
        %v631 = vshll.u32 %v609, 16
        %v633 = vor.u32 %v630, %v631
        %v635 = vshrl.u32 %v610, 16
        %v637 = vrot.slane %v635, 7
        %v638 = vshll.u32 %v610, 16
        %v640 = vor.u32 %v637, %v638
        %v642 = vshrl.u32 %v611, 16
        %v644 = vrot.slane %v642, 7
        %v645 = vshll.u32 %v611, 16
        %v647 = vor.u32 %v644, %v645
        %v649 = vshrl.u32 %v612, 16
        %v651 = vrot.slane %v649, 7
        %v652 = vshll.u32 %v612, 16
        %v654 = vor.u32 %v651, %v652
        %v656 = vshrl.u32 %v613, 16
        %v658 = vrot.slane %v656, 7
        %v659 = vshll.u32 %v613, 16
        %v661 = vor.u32 %v658, %v659
        %v663 = vshrl.u32 %v614, 16
        %v665 = vrot.slane %v663, 7
        %v666 = vshll.u32 %v614, 16
        %v668 = vor.u32 %v665, %v666
        %v670 = vshrl.u32 %v615, 16
        %v672 = vrot.slane %v670, 7
        %v673 = vshll.u32 %v615, 16
        %v675 = vor.u32 %v672, %v673
        %v677 = vshrl.u32 %v616, 16
        %v679 = vrot.slane %v677, 7
        %v680 = vshll.u32 %v616, 16
        %v682 = vor.u32 %v679, %v680
        %v684 = vshrl.u32 %v617, 16
        %v686 = vrot.slane %v684, 7
        %v687 = vshll.u32 %v617, 16
        %v689 = vor.u32 %v686, %v687
        %v691 = vshrl.u32 %v618, 16
        %v693 = vrot.slane %v691, 7
        %v694 = vshll.u32 %v618, 16
        %v696 = vor.u32 %v693, %v694
        %v698 = vshrl.u32 %v619, 16
        %v700 = vrot.slane %v698, 7
        %v701 = vshll.u32 %v619, 16
        %v703 = vor.u32 %v700, %v701
        %v705 = vshrl.u32 %v620, 16
        %v707 = vrot.slane %v705, 7
        %v708 = vshll.u32 %v620, 16
        %v710 = vor.u32 %v707, %v708
        %v712 = vshrl.u32 %v621, 16
        %v714 = vrot.slane %v712, 7
        %v715 = vshll.u32 %v621, 16
        %v717 = vor.u32 %v714, %v715
        %v719 = vshrl.u32 %v622, 16
        %v721 = vrot.slane %v719, 7
        %v722 = vshll.u32 %v622, 16
        %v724 = vor.u32 %v721, %v722
        %v726 = vshrl.u32 %v623, 16
        %v728 = vrot.slane %v726, 7
        %v729 = vshll.u32 %v623, 16
        %v731 = vor.u32 %v728, %v729
        %v733 = vshrl.u32 %v624, 16
        %v735 = vrot.slane %v733, 7
        %v736 = vshll.u32 %v624, 16
        %v738 = vor.u32 %v735, %v736
        %v740 = vshrl.u32 %v625, 16
        %v742 = vrot.slane %v740, 7
        %v743 = vshll.u32 %v625, 16
        %v745 = vor.u32 %v742, %v743
        %v747 = vshrl.u32 %v626, 16
        %v749 = vrot.slane %v747, 7
        %v750 = vshll.u32 %v626, 16
        %v752 = vor.u32 %v749, %v750
        %vm771 = vcmask 1040384
        %vm772 = vsmask.f32 256
        %vm773 = vmand %vm771, %vm772
        %v774 = vsel %vm773, 0, %v633
        %v775 = vsel %vm773, 0, %v640
        %v776 = vsel %vm773, 0, %v647
        %v777 = vsel %vm773, 0, %v654
        %v778 = vsel %vm773, 0, %v661
        %v779 = vsel %vm773, 0, %v668
        %v780 = vsel %vm773, 0, %v675
        %v781 = vsel %vm773, 0, %v682
        %v782 = vsel %vm773, 0, %v689
        %v783 = vsel %vm773, 0, %v696
        %v784 = vsel %vm773, 0, %v703
        %v785 = vsel %vm773, 0, %v710
        %v786 = vsel %vm773, 0, %v717
        %v787 = vsel %vm773, 0, %v724
        %v788 = vsel %vm773, 0, %v731
        %v789 = vsel %vm773, 0, %v738
        %v790 = vsel %vm773, 0, %v745
        %v791 = vsel %vm773, 0, %v752
        %v792 = vrot.slane %v631, 1
        %v793 = vor.u32 %v628, %v792
        %v794 = vrot.slane %v638, 1
        %v795 = vor.u32 %v635, %v794
        %v796 = vrot.slane %v645, 1
        %v797 = vor.u32 %v642, %v796
        %v798 = vrot.slane %v652, 1
        %v799 = vor.u32 %v649, %v798
        %v800 = vrot.slane %v659, 1
        %v801 = vor.u32 %v656, %v800
        %v802 = vrot.slane %v666, 1
        %v803 = vor.u32 %v663, %v802
        %v804 = vrot.slane %v673, 1
        %v805 = vor.u32 %v670, %v804
        %v806 = vrot.slane %v680, 1
        %v807 = vor.u32 %v677, %v806
        %v808 = vrot.slane %v687, 1
        %v809 = vor.u32 %v684, %v808
        %v810 = vrot.slane %v694, 1
        %v811 = vor.u32 %v691, %v810
        %v812 = vrot.slane %v701, 1
        %v813 = vor.u32 %v698, %v812
        %v814 = vrot.slane %v708, 1
        %v815 = vor.u32 %v705, %v814
        %v816 = vrot.slane %v715, 1
        %v817 = vor.u32 %v712, %v816
        %v818 = vrot.slane %v722, 1
        %v819 = vor.u32 %v719, %v818
        %v820 = vrot.slane %v729, 1
        %v821 = vor.u32 %v726, %v820
        %v822 = vrot.slane %v736, 1
        %v823 = vor.u32 %v733, %v822
        %v824 = vrot.slane %v743, 1
        %v825 = vor.u32 %v740, %v824
        %v826 = vrot.slane %v750, 1
        %v827 = vor.u32 %v747, %v826
        %vm846 = vcmask 1047552
        %vm847 = vsmask.f32 7424
        %vm848 = vmand %vm846, %vm847
        %v849 = vsel %vm848, %v793, 0
        %v850 = vsel %vm848, %v795, 0
        %v851 = vsel %vm848, %v797, 0
        %v852 = vsel %vm848, %v799, 0
        %v853 = vsel %vm848, %v801, 0
        %v854 = vsel %vm848, %v803, 0
        %v855 = vsel %vm848, %v805, 0
        %v856 = vsel %vm848, %v807, 0
        %v857 = vsel %vm848, %v809, 0
        %v858 = vsel %vm848, %v811, 0
        %v859 = vsel %vm848, %v813, 0
        %v860 = vsel %vm848, %v815, 0
        %v861 = vsel %vm848, %v817, 0
        %v862 = vsel %vm848, %v819, 0
        %v863 = vsel %vm848, %v821, 0
        %v864 = vsel %vm848, %v823, 0
        %v865 = vsel %vm848, %v825, 0
        %v866 = vsel %vm848, %v827, 0
        %867 = vrot.lane.b32.xlu0 %v609, 4
        %v868 = vpop.permute.xlu0 %867
        %869 = vrot.lane.b32.xlu0 %v610, 4
        %v870 = vpop.permute.xlu0 %869
        %871 = vrot.lane.b32.xlu0 %v611, 4
        %v872 = vpop.permute.xlu0 %871
        %873 = vrot.lane.b32.xlu0 %v612, 4
        %v874 = vpop.permute.xlu0 %873
        %875 = vrot.lane.b32.xlu0 %v613, 4
        %v876 = vpop.permute.xlu0 %875
        %877 = vrot.lane.b32.xlu0 %v614, 4
        %v878 = vpop.permute.xlu0 %877
        %879 = vrot.lane.b32.xlu0 %v615, 4
        %v880 = vpop.permute.xlu0 %879
        %881 = vrot.lane.b32.xlu0 %v616, 4
        %v882 = vpop.permute.xlu0 %881
        %883 = vrot.lane.b32.xlu0 %v617, 4
        %v884 = vpop.permute.xlu0 %883
        %885 = vrot.lane.b32.xlu0 %v618, 4
        %v886 = vpop.permute.xlu0 %885
        %887 = vrot.lane.b32.xlu0 %v619, 4
        %v888 = vpop.permute.xlu0 %887
        %889 = vrot.lane.b32.xlu0 %v620, 4
        %v890 = vpop.permute.xlu0 %889
        %891 = vrot.lane.b32.xlu0 %v621, 4
        %v892 = vpop.permute.xlu0 %891
        %893 = vrot.lane.b32.xlu0 %v622, 4
        %v894 = vpop.permute.xlu0 %893
        %895 = vrot.lane.b32.xlu0 %v623, 4
        %v896 = vpop.permute.xlu0 %895
        %897 = vrot.lane.b32.xlu0 %v624, 4
        %v898 = vpop.permute.xlu0 %897
        %899 = vrot.lane.b32.xlu0 %v625, 4
        %v900 = vpop.permute.xlu0 %899
        %901 = vrot.lane.b32.xlu0 %v626, 4
        %v902 = vpop.permute.xlu0 %901
        %921 = vrot.lane.b32.xlu0 %v849, 8
        %v922 = vpop.permute.xlu0 %921
        %923 = vrot.lane.b32.xlu0 %v850, 8
        %v924 = vpop.permute.xlu0 %923
        %925 = vrot.lane.b32.xlu0 %v851, 8
        %v926 = vpop.permute.xlu0 %925
        %927 = vrot.lane.b32.xlu0 %v852, 8
        %v928 = vpop.permute.xlu0 %927
        %929 = vrot.lane.b32.xlu0 %v853, 8
        %v930 = vpop.permute.xlu0 %929
        %931 = vrot.lane.b32.xlu0 %v854, 8
        %v932 = vpop.permute.xlu0 %931
        %933 = vrot.lane.b32.xlu0 %v855, 8
        %v934 = vpop.permute.xlu0 %933
        %935 = vrot.lane.b32.xlu0 %v856, 8
        %v936 = vpop.permute.xlu0 %935
        %937 = vrot.lane.b32.xlu0 %v857, 8
        %v938 = vpop.permute.xlu0 %937
        %939 = vrot.lane.b32.xlu0 %v858, 8
        %v940 = vpop.permute.xlu0 %939
        %941 = vrot.lane.b32.xlu0 %v859, 8
        %v942 = vpop.permute.xlu0 %941
        %943 = vrot.lane.b32.xlu0 %v860, 8
        %v944 = vpop.permute.xlu0 %943
        %945 = vrot.lane.b32.xlu0 %v861, 8
        %v946 = vpop.permute.xlu0 %945
        %947 = vrot.lane.b32.xlu0 %v862, 8
        %v948 = vpop.permute.xlu0 %947
        %949 = vrot.lane.b32.xlu0 %v863, 8
        %v950 = vpop.permute.xlu0 %949
        %951 = vrot.lane.b32.xlu0 %v864, 8
        %v952 = vpop.permute.xlu0 %951
        %953 = vrot.lane.b32.xlu0 %v865, 8
        %v954 = vpop.permute.xlu0 %953
        %955 = vrot.lane.b32.xlu0 %v866, 8
        %v956 = vpop.permute.xlu0 %955
        %vm957 = vcmask 31744
        %v960 = vsel %vm957, %v774, %v868
        %v963 = vsel %vm957, %v775, %v870
        %v966 = vsel %vm957, %v776, %v872
        %v969 = vsel %vm957, %v777, %v874
        %v972 = vsel %vm957, %v778, %v876
        %v975 = vsel %vm957, %v779, %v878
        %v978 = vsel %vm957, %v780, %v880
        %v981 = vsel %vm957, %v781, %v882
        %v984 = vsel %vm957, %v782, %v884
        %v987 = vsel %vm957, %v783, %v886
        %v990 = vsel %vm957, %v784, %v888
        %v993 = vsel %vm957, %v785, %v890
        %v996 = vsel %vm957, %v786, %v892
        %v999 = vsel %vm957, %v787, %v894
        %v1002 = vsel %vm957, %v788, %v896
        %v1005 = vsel %vm957, %v789, %v898
        %v1008 = vsel %vm957, %v790, %v900
        %v1011 = vsel %vm957, %v791, %v902
        %vm1012 = vcmask 64512
        %v1014 = vsel %vm1012, %v960, %v922
        %v1016 = vsel %vm1012, %v963, %v924
        %v1018 = vsel %vm1012, %v966, %v926
        %v1020 = vsel %vm1012, %v969, %v928
        %v1022 = vsel %vm1012, %v972, %v930
        %v1024 = vsel %vm1012, %v975, %v932
        %v1026 = vsel %vm1012, %v978, %v934
        %v1028 = vsel %vm1012, %v981, %v936
        %v1030 = vsel %vm1012, %v984, %v938
        %v1032 = vsel %vm1012, %v987, %v940
        %v1034 = vsel %vm1012, %v990, %v942
        %v1036 = vsel %vm1012, %v993, %v944
        %v1038 = vsel %vm1012, %v996, %v946
        %v1040 = vsel %vm1012, %v999, %v948
        %v1042 = vsel %vm1012, %v1002, %v950
        %v1044 = vsel %vm1012, %v1005, %v952
        %v1046 = vsel %vm1012, %v1008, %v954
        %v1048 = vsel %vm1012, %v1011, %v956
        %1065 = vrot.lane.b32.xlu0 %v1016, 12
        %v1066 = vpop.permute.xlu0 %1065
        %1067 = vrot.lane.b32.xlu0 %v1018, 12
        %v1068 = vpop.permute.xlu0 %1067
        %1069 = vrot.lane.b32.xlu0 %v1020, 12
        %v1070 = vpop.permute.xlu0 %1069
        %1071 = vrot.lane.b32.xlu0 %v1022, 12
        %v1072 = vpop.permute.xlu0 %1071
        %1073 = vrot.lane.b32.xlu0 %v1024, 12
        %v1074 = vpop.permute.xlu0 %1073
        %1075 = vrot.lane.b32.xlu0 %v1026, 12
        %v1076 = vpop.permute.xlu0 %1075
        %1077 = vrot.lane.b32.xlu0 %v1028, 12
        %v1078 = vpop.permute.xlu0 %1077
        %1079 = vrot.lane.b32.xlu0 %v1030, 12
        %v1080 = vpop.permute.xlu0 %1079
        %1081 = vrot.lane.b32.xlu0 %v1032, 12
        %v1082 = vpop.permute.xlu0 %1081
        %1083 = vrot.lane.b32.xlu0 %v1034, 12
        %v1084 = vpop.permute.xlu0 %1083
        %1085 = vrot.lane.b32.xlu0 %v1036, 12
        %v1086 = vpop.permute.xlu0 %1085
        %1087 = vrot.lane.b32.xlu0 %v1038, 12
        %v1088 = vpop.permute.xlu0 %1087
        %1089 = vrot.lane.b32.xlu0 %v1040, 12
        %v1090 = vpop.permute.xlu0 %1089
        %1091 = vrot.lane.b32.xlu0 %v1042, 12
        %v1092 = vpop.permute.xlu0 %1091
        %1093 = vrot.lane.b32.xlu0 %v1044, 12
        %v1094 = vpop.permute.xlu0 %1093
        %1095 = vrot.lane.b32.xlu0 %v1046, 12
        %v1096 = vpop.permute.xlu0 %1095
        %1098 = vrot.lane.b32.xlu0 %v1018, 24
        %v1099 = vpop.permute.xlu0 %1098
        %1100 = vrot.lane.b32.xlu0 %v1020, 24
        %v1101 = vpop.permute.xlu0 %1100
        %1102 = vrot.lane.b32.xlu0 %v1022, 24
        %v1103 = vpop.permute.xlu0 %1102
        %1104 = vrot.lane.b32.xlu0 %v1024, 24
        %v1105 = vpop.permute.xlu0 %1104
        %1106 = vrot.lane.b32.xlu0 %v1026, 24
        %v1107 = vpop.permute.xlu0 %1106
        %1108 = vrot.lane.b32.xlu0 %v1028, 24
        %v1109 = vpop.permute.xlu0 %1108
        %1110 = vrot.lane.b32.xlu0 %v1030, 24
        %v1111 = vpop.permute.xlu0 %1110
        %1112 = vrot.lane.b32.xlu0 %v1032, 24
        %v1113 = vpop.permute.xlu0 %1112
        %1114 = vrot.lane.b32.xlu0 %v1034, 24
        %v1115 = vpop.permute.xlu0 %1114
        %1116 = vrot.lane.b32.xlu0 %v1036, 24
        %v1117 = vpop.permute.xlu0 %1116
        %1118 = vrot.lane.b32.xlu0 %v1038, 24
        %v1119 = vpop.permute.xlu0 %1118
        %1120 = vrot.lane.b32.xlu0 %v1040, 24
        %v1121 = vpop.permute.xlu0 %1120
        %1122 = vrot.lane.b32.xlu0 %v1042, 24
        %v1123 = vpop.permute.xlu0 %1122
        %1124 = vrot.lane.b32.xlu0 %v1044, 24
        %v1125 = vpop.permute.xlu0 %1124
        %1126 = vrot.lane.b32.xlu0 %v1046, 24
        %v1127 = vpop.permute.xlu0 %1126
        %1128 = vrot.lane.b32.xlu0 %v1048, 24
        %v1129 = vpop.permute.xlu0 %1128
        %vm1130 = vcmask 97280
        %v1132 = vsel %vm1130, %v1014, %v1066
        %v1134 = vsel %vm1130, %v1016, %v1068
        %v1136 = vsel %vm1130, %v1018, %v1070
        %v1138 = vsel %vm1130, %v1020, %v1072
        %v1140 = vsel %vm1130, %v1022, %v1074
        %v1142 = vsel %vm1130, %v1024, %v1076
        %v1144 = vsel %vm1130, %v1026, %v1078
        %v1146 = vsel %vm1130, %v1028, %v1080
        %v1148 = vsel %vm1130, %v1030, %v1082
        %v1150 = vsel %vm1130, %v1032, %v1084
        %v1152 = vsel %vm1130, %v1034, %v1086
        %v1154 = vsel %vm1130, %v1036, %v1088
        %v1156 = vsel %vm1130, %v1038, %v1090
        %v1158 = vsel %vm1130, %v1040, %v1092
        %v1160 = vsel %vm1130, %v1042, %v1094
        %v1162 = vsel %vm1130, %v1044, %v1096
        %vm1163 = vcmask 195584
        %v1165 = vsel %vm1163, %v1132, %v1099
        %v1167 = vsel %vm1163, %v1134, %v1101
        %v1169 = vsel %vm1163, %v1136, %v1103
        %v1171 = vsel %vm1163, %v1138, %v1105
        %v1173 = vsel %vm1163, %v1140, %v1107
        %v1175 = vsel %vm1163, %v1142, %v1109
        %v1177 = vsel %vm1163, %v1144, %v1111
        %v1179 = vsel %vm1163, %v1146, %v1113
        %v1181 = vsel %vm1163, %v1148, %v1115
        %v1183 = vsel %vm1163, %v1150, %v1117
        %v1185 = vsel %vm1163, %v1152, %v1119
        %v1187 = vsel %vm1163, %v1154, %v1121
        %v1189 = vsel %vm1163, %v1156, %v1123
        %v1191 = vsel %vm1163, %v1158, %v1125
        %v1193 = vsel %vm1163, %v1160, %v1127
        %v1195 = vsel %vm1163, %v1162, %v1129
        %v1196 = vld [vmem:[%s3] sm:$0xf]
        %v1197 = vld [vmem:[%s3 + $0x4] sm:$0xf]
        %v1198 = vld [vmem:[%s3 + $0x8] sm:$0xf]
        %v1199 = vld [vmem:[%s3 + $0xc] sm:$0xf]
        %v1200 = vld [vmem:[%s3 + $0x10] sm:$0x3]
        %v1206 = vunpack.c.l.b16 %v1196
        %v1207 = vunpack.c.l.b16 %v1197
        %v1208 = vunpack.c.l.b16 %v1198
        %v1209 = vunpack.c.l.b16 %v1199
        %v1210 = vunpack.c.l.b16 %v1200
        %v1211 = vpack.c.b16 %v1207, %v1206
        %v1212 = vpack.c.b16 %v1209, %v1208
        %v1213 = vpack.c.b16 %v1210, %v1210
        %vm1216 = vcmask 293888
        %v1217 = vsel %vm1216, %v1165, 0
        %v1219 = vsel %vm1216, %v1167, 0
        %v1221 = vsel %vm1216, %v1169, 0
        %v1223 = vsel %vm1216, %v1171, 0
        %v1225 = vsel %vm1216, %v1173, 0
        %v1227 = vsel %vm1216, %v1175, 0
        %v1229 = vsel %vm1216, %v1177, 0
        %v1231 = vsel %vm1216, %v1179, 0
        %v1233 = vsel %vm1216, %v1181, 0
        %v1235 = vsel %vm1216, %v1183, 0
        %v1237 = vsel %vm1216, %v1185, 0
        %v1239 = vsel %vm1216, %v1187, 0
        %v1241 = vsel %vm1216, %v1189, 0
        %v1243 = vsel %vm1216, %v1191, 0
        %v1245 = vsel %vm1216, %v1193, 0
        %v1247 = vsel %vm1216, %v1195, 0
        %vm1249 = vcmask 1041408
        %v1251 = vsel %vm1249, %v1213, 0
        %1253 = vmatprep.subr.bf16.mxu0 0
        %1254 = vmatpush1.bf16.msra.mxu0 %v1211
        %1255 = vmatprep.subr.bf16.mxu0 0
        %1256 = vmatpush1.bf16.msra.mxu0 %v1212
        %1257 = vmatprep.subr.bf16.mxu0 0
        %1258 = vmatpush1.bf16.msra.mxu0 %v1251
        %1259 = vmatprep.subr.bf16.mxu0 0
        %1260 = vmatpush1.bf16.msra.mxu0 0
        %1261 = vmatprep.subr.bf16.mxu0 0
        %1262 = vmatpush1.bf16.msra.mxu0 0
        %1263 = vmatprep.subr.bf16.mxu0 0
        %1264 = vmatpush1.bf16.msra.mxu0 0
        %1265 = vmatprep.subr.bf16.mxu0 0
        %1266 = vmatpush1.bf16.msra.mxu0 0
        %1267 = vmatprep.subr.bf16.mxu0 0
        %1268 = vmatpush1.bf16.msra.mxu0 0
        %1269 = vmatprep.subr.bf16.mxu0 0
        %1270 = vmatpush1.bf16.msra.mxu0 0
        %1271 = vmatprep.subr.bf16.mxu0 0
        %1272 = vmatpush1.bf16.msra.mxu0 0
        %1273 = vmatprep.subr.bf16.mxu0 0
        %1274 = vmatpush1.bf16.msra.mxu0 0
        %1275 = vmatprep.subr.bf16.mxu0 0
        %1276 = vmatpush1.bf16.msra.mxu0 0
        %1277 = vmatprep.subr.bf16.mxu0 0
        %1278 = vmatpush1.bf16.msra.mxu0 0
        %1279 = vmatprep.subr.bf16.mxu0 0
        %1280 = vmatpush1.bf16.msra.mxu0 0
        %1281 = vmatprep.subr.bf16.mxu0 0
        %1282 = vmatpush1.bf16.msra.mxu0 0
        %1283 = vmatprep.subr.bf16.mxu0 0
        %1284 = vmatpush1.bf16.msra.mxu0 0
        %1285 = vmatprep.mubr.bf16.mxu0 0
        %1286 = vmatmul.mubr.bf16.gmra.mrb[0].mxu0 %v1217
        %v1287 = vpop.f32.mrb[0].mxu0
        %v1288 = vadd.f32 0.0, %v1287
        %v1289 = vpop.f32.mrb[0].mxu0
        %v1290 = vpop.f32.mrb[0].mxu0
        %v1291 = vadd.f32 0.0, %v1290
        %v1292 = vpop.f32.mrb[0].mxu0
        %1293 = vmatprep.mubr.bf16.mxu0 0
        %1294 = vmatmul.mubr.bf16.gmra.mrb[0].mxu0 %v1219
        %v1295 = vpop.f32.mrb[0].mxu0
        %v1296 = vadd.f32 0.0, %v1295
        %v1297 = vpop.f32.mrb[0].mxu0
        %v1298 = vpop.f32.mrb[0].mxu0
        %v1299 = vadd.f32 0.0, %v1298
        %v1300 = vpop.f32.mrb[0].mxu0
        %1301 = vmatprep.mubr.bf16.mxu0 0
        %1302 = vmatmul.mubr.bf16.gmra.mrb[0].mxu0 %v1221
        %v1303 = vpop.f32.mrb[0].mxu0
        %v1304 = vadd.f32 0.0, %v1303
        %v1305 = vpop.f32.mrb[0].mxu0
        %v1306 = vpop.f32.mrb[0].mxu0
        %v1307 = vadd.f32 0.0, %v1306
        %v1308 = vpop.f32.mrb[0].mxu0
        %1309 = vmatprep.mubr.bf16.mxu0 0
        %1310 = vmatmul.mubr.bf16.gmra.mrb[0].mxu0 %v1223
        %v1311 = vpop.f32.mrb[0].mxu0
        %v1312 = vadd.f32 0.0, %v1311
        %v1313 = vpop.f32.mrb[0].mxu0
        %v1314 = vpop.f32.mrb[0].mxu0
        %v1315 = vadd.f32 0.0, %v1314
        %v1316 = vpop.f32.mrb[0].mxu0
        %1317 = vmatprep.mubr.bf16.mxu0 0
        %1318 = vmatmul.mubr.bf16.gmra.mrb[0].mxu0 %v1225
        %v1319 = vpop.f32.mrb[0].mxu0
        %v1320 = vadd.f32 0.0, %v1319
        %v1321 = vpop.f32.mrb[0].mxu0
        %v1322 = vpop.f32.mrb[0].mxu0
        %v1323 = vadd.f32 0.0, %v1322
        %v1324 = vpop.f32.mrb[0].mxu0
        %1325 = vmatprep.mubr.bf16.mxu0 0
        %1326 = vmatmul.mubr.bf16.gmra.mrb[0].mxu0 %v1227
        %v1327 = vpop.f32.mrb[0].mxu0
        %v1328 = vadd.f32 0.0, %v1327
        %v1329 = vpop.f32.mrb[0].mxu0
        %v1330 = vpop.f32.mrb[0].mxu0
        %v1331 = vadd.f32 0.0, %v1330
        %v1332 = vpop.f32.mrb[0].mxu0
        %1333 = vmatprep.mubr.bf16.mxu0 0
        %1334 = vmatmul.mubr.bf16.gmra.mrb[0].mxu0 %v1229
        %v1335 = vpop.f32.mrb[0].mxu0
        %v1336 = vadd.f32 0.0, %v1335
        %v1337 = vpop.f32.mrb[0].mxu0
        %v1338 = vpop.f32.mrb[0].mxu0
        %v1339 = vadd.f32 0.0, %v1338
        %v1340 = vpop.f32.mrb[0].mxu0
        %1341 = vmatprep.mubr.bf16.mxu0 0
        %1342 = vmatmul.mubr.bf16.gmra.mrb[0].mxu0 %v1231
        %v1343 = vpop.f32.mrb[0].mxu0
        %v1344 = vadd.f32 0.0, %v1343
        %v1345 = vpop.f32.mrb[0].mxu0
        %v1346 = vpop.f32.mrb[0].mxu0
        %v1347 = vadd.f32 0.0, %v1346
        %v1348 = vpop.f32.mrb[0].mxu0
        %1349 = vmatprep.mubr.bf16.mxu0 0
        %1350 = vmatmul.mubr.bf16.gmra.mrb[0].mxu0 %v1233
        %v1351 = vpop.f32.mrb[0].mxu0
        %v1352 = vadd.f32 0.0, %v1351
        %v1353 = vpop.f32.mrb[0].mxu0
        %v1354 = vpop.f32.mrb[0].mxu0
        %v1355 = vadd.f32 0.0, %v1354
        %v1356 = vpop.f32.mrb[0].mxu0
        %1357 = vmatprep.mubr.bf16.mxu0 0
        %1358 = vmatmul.mubr.bf16.gmra.mrb[0].mxu0 %v1235
        %v1359 = vpop.f32.mrb[0].mxu0
        %v1360 = vadd.f32 0.0, %v1359
        %v1361 = vpop.f32.mrb[0].mxu0
        %v1362 = vpop.f32.mrb[0].mxu0
        %v1363 = vadd.f32 0.0, %v1362
        %v1364 = vpop.f32.mrb[0].mxu0
        %1365 = vmatprep.mubr.bf16.mxu0 0
        %1366 = vmatmul.mubr.bf16.gmra.mrb[0].mxu0 %v1237
        %v1367 = vpop.f32.mrb[0].mxu0
        %v1368 = vadd.f32 0.0, %v1367
        %v1369 = vpop.f32.mrb[0].mxu0
        %v1370 = vpop.f32.mrb[0].mxu0
        %v1371 = vadd.f32 0.0, %v1370
        %v1372 = vpop.f32.mrb[0].mxu0
        %1373 = vmatprep.mubr.bf16.mxu0 0
        %1374 = vmatmul.mubr.bf16.gmra.mrb[0].mxu0 %v1239
        %v1375 = vpop.f32.mrb[0].mxu0
        %v1376 = vadd.f32 0.0, %v1375
        %v1377 = vpop.f32.mrb[0].mxu0
        %v1378 = vpop.f32.mrb[0].mxu0
        %v1379 = vadd.f32 0.0, %v1378
        %v1380 = vpop.f32.mrb[0].mxu0
        %1381 = vmatprep.mubr.bf16.mxu0 0
        %1382 = vmatmul.mubr.bf16.gmra.mrb[0].mxu0 %v1241
        %v1383 = vpop.f32.mrb[0].mxu0
        %v1384 = vadd.f32 0.0, %v1383
        %v1385 = vpop.f32.mrb[0].mxu0
        %v1386 = vpop.f32.mrb[0].mxu0
        %v1387 = vadd.f32 0.0, %v1386
        %v1388 = vpop.f32.mrb[0].mxu0
        %1389 = vmatprep.mubr.bf16.mxu0 0
        %1390 = vmatmul.mubr.bf16.gmra.mrb[0].mxu0 %v1243
        %v1391 = vpop.f32.mrb[0].mxu0
        %v1392 = vadd.f32 0.0, %v1391
        %v1393 = vpop.f32.mrb[0].mxu0
        %v1394 = vpop.f32.mrb[0].mxu0
        %v1395 = vadd.f32 0.0, %v1394
        %v1396 = vpop.f32.mrb[0].mxu0
        %1397 = vmatprep.mubr.bf16.mxu0 0
        %1398 = vmatmul.mubr.bf16.gmra.mrb[0].mxu0 %v1245
        %v1399 = vpop.f32.mrb[0].mxu0
        %v1400 = vadd.f32 0.0, %v1399
        %v1401 = vpop.f32.mrb[0].mxu0
        %v1402 = vpop.f32.mrb[0].mxu0
        %v1403 = vadd.f32 0.0, %v1402
        %v1404 = vpop.f32.mrb[0].mxu0
        %1405 = vmatprep.mubr.bf16.mxu0 0
        %1406 = vmatmul.mubr.bf16.gmra.mrb[0].mxu0 %v1247
        %v1407 = vpop.f32.mrb[0].mxu0
        %v1408 = vadd.f32 0.0, %v1407
        %v1409 = vpop.f32.mrb[0].mxu0
        %v1410 = vpop.f32.mrb[0].mxu0
        %v1411 = vadd.f32 0.0, %v1410
        %v1412 = vpop.f32.mrb[0].mxu0
        %1413 = vdwg.mxu0
        %v1414 = vmax.f32 %v1288, 0.0
        %v1415 = vmax.f32 %v1291, 0.0
        %v1416 = vmax.f32 %v1296, 0.0
        %v1417 = vmax.f32 %v1299, 0.0
        %v1418 = vmax.f32 %v1304, 0.0
        %v1419 = vmax.f32 %v1307, 0.0
        %v1420 = vmax.f32 %v1312, 0.0
        %v1421 = vmax.f32 %v1315, 0.0
        %v1422 = vmax.f32 %v1320, 0.0
        %v1423 = vmax.f32 %v1323, 0.0
        %v1424 = vmax.f32 %v1328, 0.0
        %v1425 = vmax.f32 %v1331, 0.0
        %v1426 = vmax.f32 %v1336, 0.0
        %v1427 = vmax.f32 %v1339, 0.0
        %v1428 = vmax.f32 %v1344, 0.0
        %v1429 = vmax.f32 %v1347, 0.0
        %v1430 = vmax.f32 %v1352, 0.0
        %v1431 = vmax.f32 %v1355, 0.0
        %v1432 = vmax.f32 %v1360, 0.0
        %v1433 = vmax.f32 %v1363, 0.0
        %v1434 = vmax.f32 %v1368, 0.0
        %v1435 = vmax.f32 %v1371, 0.0
        %v1436 = vmax.f32 %v1376, 0.0
        %v1437 = vmax.f32 %v1379, 0.0
        %v1438 = vmax.f32 %v1384, 0.0
        %v1439 = vmax.f32 %v1387, 0.0
        %v1440 = vmax.f32 %v1392, 0.0
        %v1441 = vmax.f32 %v1395, 0.0
        %v1442 = vmax.f32 %v1400, 0.0
        %v1443 = vmax.f32 %v1403, 0.0
        %v1444 = vmax.f32 %v1408, 0.0
        %v1445 = vmax.f32 %v1411, 0.0
        %v1462 = vrot.slane %v1416, 7
        %vm1463 = vcmask 1041409
        %v1464 = vsel %vm1463, %v1462, %v1414
        %v1465 = vrot.slane %v1418, 6
        %vm1466 = vcmask 1042434
        %v1467 = vsel %vm1466, %v1465, %v1464
        %v1468 = vrot.slane %v1420, 5
        %vm1469 = vcmask 1043459
        %v1470 = vsel %vm1469, %v1468, %v1467
        %v1471 = vrot.slane %v1422, 4
        %vm1472 = vcmask 1044484
        %v1473 = vsel %vm1472, %v1471, %v1470
        %v1474 = vrot.slane %v1424, 3
        %vm1475 = vcmask 1045509
        %v1476 = vsel %vm1475, %v1474, %v1473
        %v1477 = vrot.slane %v1426, 2
        %vm1478 = vcmask 1046534
        %v1479 = vsel %vm1478, %v1477, %v1476
        %v1480 = vrot.slane %v1428, 1
        %vm1481 = vcmask 1047559
        %v1482 = vsel %vm1481, %v1480, %v1479
        %v1483 = vrot.slane %v1432, 7
        %v1484 = vsel %vm1463, %v1483, %v1430
        %v1485 = vrot.slane %v1434, 6
        %v1486 = vsel %vm1466, %v1485, %v1484
        %v1487 = vrot.slane %v1436, 5
        %v1488 = vsel %vm1469, %v1487, %v1486
        %v1489 = vrot.slane %v1438, 4
        %v1490 = vsel %vm1472, %v1489, %v1488
        %v1491 = vrot.slane %v1440, 3
        %v1492 = vsel %vm1475, %v1491, %v1490
        %v1493 = vrot.slane %v1442, 2
        %v1494 = vsel %vm1478, %v1493, %v1492
        %v1495 = vrot.slane %v1444, 1
        %v1496 = vsel %vm1481, %v1495, %v1494
        %v1499 = vrot.slane %v1414, 1
        %v1500 = vsel %vm1463, %v1416, %v1499
        %v1501 = vrot.slane %v1418, 7
        %v1502 = vsel %vm1466, %v1501, %v1500
        %v1503 = vrot.slane %v1420, 6
        %v1504 = vsel %vm1469, %v1503, %v1502
        %v1505 = vrot.slane %v1422, 5
        %v1506 = vsel %vm1472, %v1505, %v1504
        %v1507 = vrot.slane %v1424, 4
        %v1508 = vsel %vm1475, %v1507, %v1506
        %v1509 = vrot.slane %v1426, 3
        %v1510 = vsel %vm1478, %v1509, %v1508
        %v1511 = vrot.slane %v1428, 2
        %v1512 = vsel %vm1481, %v1511, %v1510
        %v1513 = vrot.slane %v1430, 1
        %v1514 = vsel %vm1463, %v1432, %v1513
        %v1515 = vrot.slane %v1434, 7
        %v1516 = vsel %vm1466, %v1515, %v1514
        %v1517 = vrot.slane %v1436, 6
        %v1518 = vsel %vm1469, %v1517, %v1516
        %v1519 = vrot.slane %v1438, 5
        %v1520 = vsel %vm1472, %v1519, %v1518
        %v1521 = vrot.slane %v1440, 4
        %v1522 = vsel %vm1475, %v1521, %v1520
        %v1523 = vrot.slane %v1442, 3
        %v1524 = vsel %vm1478, %v1523, %v1522
        %v1525 = vrot.slane %v1444, 2
        %v1526 = vsel %vm1481, %v1525, %v1524
        %1527 = vrot.lane.b32.xlu0 %v1512, 8
        %v1528 = vpop.permute.xlu0 %1527
        %1529 = vrot.lane.b32.xlu0 %v1526, 8
        %v1530 = vpop.permute.xlu0 %1529
        %v1533 = vrot.slane %v1414, 2
        %v1534 = vrot.slane %v1416, 1
        %v1535 = vsel %vm1463, %v1534, %v1533
        %v1536 = vsel %vm1466, %v1418, %v1535
        %v1537 = vrot.slane %v1420, 7
        %v1538 = vsel %vm1469, %v1537, %v1536
        %v1539 = vrot.slane %v1422, 6
        %v1540 = vsel %vm1472, %v1539, %v1538
        %v1541 = vrot.slane %v1424, 5
        %v1542 = vsel %vm1475, %v1541, %v1540
        %v1543 = vrot.slane %v1426, 4
        %v1544 = vsel %vm1478, %v1543, %v1542
        %v1545 = vrot.slane %v1428, 3
        %v1546 = vsel %vm1481, %v1545, %v1544
        %v1547 = vrot.slane %v1430, 2
        %v1548 = vrot.slane %v1432, 1
        %v1549 = vsel %vm1463, %v1548, %v1547
        %v1550 = vsel %vm1466, %v1434, %v1549
        %v1551 = vrot.slane %v1436, 7
        %v1552 = vsel %vm1469, %v1551, %v1550
        %v1553 = vrot.slane %v1438, 6
        %v1554 = vsel %vm1472, %v1553, %v1552
        %v1555 = vrot.slane %v1440, 5
        %v1556 = vsel %vm1475, %v1555, %v1554
        %v1557 = vrot.slane %v1442, 4
        %v1558 = vsel %vm1478, %v1557, %v1556
        %v1559 = vrot.slane %v1444, 3
        %v1560 = vsel %vm1481, %v1559, %v1558
        %1561 = vrot.lane.b32.xlu0 %v1546, 16
        %v1562 = vpop.permute.xlu0 %1561
        %1563 = vrot.lane.b32.xlu0 %v1560, 16
        %v1564 = vpop.permute.xlu0 %1563
        %v1567 = vrot.slane %v1414, 3
        %v1568 = vrot.slane %v1416, 2
        %v1569 = vsel %vm1463, %v1568, %v1567
        %v1570 = vrot.slane %v1418, 1
        %v1571 = vsel %vm1466, %v1570, %v1569
        %v1572 = vsel %vm1469, %v1420, %v1571
        %v1573 = vrot.slane %v1422, 7
        %v1574 = vsel %vm1472, %v1573, %v1572
        %v1575 = vrot.slane %v1424, 6
        %v1576 = vsel %vm1475, %v1575, %v1574
        %v1577 = vrot.slane %v1426, 5
        %v1578 = vsel %vm1478, %v1577, %v1576
        %v1579 = vrot.slane %v1428, 4
        %v1580 = vsel %vm1481, %v1579, %v1578
        %v1581 = vrot.slane %v1430, 3
        %v1582 = vrot.slane %v1432, 2
        %v1583 = vsel %vm1463, %v1582, %v1581
        %v1584 = vrot.slane %v1434, 1
        %v1585 = vsel %vm1466, %v1584, %v1583
        %v1586 = vsel %vm1469, %v1436, %v1585
        %v1587 = vrot.slane %v1438, 7
        %v1588 = vsel %vm1472, %v1587, %v1586
        %v1589 = vrot.slane %v1440, 6
        %v1590 = vsel %vm1475, %v1589, %v1588
        %v1591 = vrot.slane %v1442, 5
        %v1592 = vsel %vm1478, %v1591, %v1590
        %v1593 = vrot.slane %v1444, 4
        %v1594 = vsel %vm1481, %v1593, %v1592
        %1595 = vrot.lane.b32.xlu0 %v1580, 24
        %v1596 = vpop.permute.xlu0 %1595
        %1597 = vrot.lane.b32.xlu0 %v1594, 24
        %v1598 = vpop.permute.xlu0 %1597
        %v1601 = vrot.slane %v1414, 4
        %v1602 = vrot.slane %v1416, 3
        %v1603 = vsel %vm1463, %v1602, %v1601
        %v1604 = vrot.slane %v1418, 2
        %v1605 = vsel %vm1466, %v1604, %v1603
        %v1606 = vrot.slane %v1420, 1
        %v1607 = vsel %vm1469, %v1606, %v1605
        %v1608 = vsel %vm1472, %v1422, %v1607
        %v1609 = vrot.slane %v1424, 7
        %v1610 = vsel %vm1475, %v1609, %v1608
        %v1611 = vrot.slane %v1426, 6
        %v1612 = vsel %vm1478, %v1611, %v1610
        %v1613 = vrot.slane %v1428, 5
        %v1614 = vsel %vm1481, %v1613, %v1612
        %v1615 = vrot.slane %v1430, 4
        %v1616 = vrot.slane %v1432, 3
        %v1617 = vsel %vm1463, %v1616, %v1615
        %v1618 = vrot.slane %v1434, 2
        %v1619 = vsel %vm1466, %v1618, %v1617
        %v1620 = vrot.slane %v1436, 1
        %v1621 = vsel %vm1469, %v1620, %v1619
        %v1622 = vsel %vm1472, %v1438, %v1621
        %v1623 = vrot.slane %v1440, 7
        %v1624 = vsel %vm1475, %v1623, %v1622
        %v1625 = vrot.slane %v1442, 6
        %v1626 = vsel %vm1478, %v1625, %v1624
        %v1627 = vrot.slane %v1444, 5
        %v1628 = vsel %vm1481, %v1627, %v1626
        %1629 = vrot.lane.b32.xlu0 %v1614, 32
        %v1630 = vpop.permute.xlu0 %1629
        %1631 = vrot.lane.b32.xlu0 %v1628, 32
        %v1632 = vpop.permute.xlu0 %1631
        %v1635 = vrot.slane %v1414, 5
        %v1636 = vrot.slane %v1416, 4
        %v1637 = vsel %vm1463, %v1636, %v1635
        %v1638 = vrot.slane %v1418, 3
        %v1639 = vsel %vm1466, %v1638, %v1637
        %v1640 = vrot.slane %v1420, 2
        %v1641 = vsel %vm1469, %v1640, %v1639
        %v1642 = vrot.slane %v1422, 1
        %v1643 = vsel %vm1472, %v1642, %v1641
        %v1644 = vsel %vm1475, %v1424, %v1643
        %v1645 = vrot.slane %v1426, 7
        %v1646 = vsel %vm1478, %v1645, %v1644
        %v1647 = vrot.slane %v1428, 6
        %v1648 = vsel %vm1481, %v1647, %v1646
        %v1649 = vrot.slane %v1430, 5
        %v1650 = vrot.slane %v1432, 4
        %v1651 = vsel %vm1463, %v1650, %v1649
        %v1652 = vrot.slane %v1434, 3
        %v1653 = vsel %vm1466, %v1652, %v1651
        %v1654 = vrot.slane %v1436, 2
        %v1655 = vsel %vm1469, %v1654, %v1653
        %v1656 = vrot.slane %v1438, 1
        %v1657 = vsel %vm1472, %v1656, %v1655
        %v1658 = vsel %vm1475, %v1440, %v1657
        %v1659 = vrot.slane %v1442, 7
        %v1660 = vsel %vm1478, %v1659, %v1658
        %v1661 = vrot.slane %v1444, 6
        %v1662 = vsel %vm1481, %v1661, %v1660
        %1663 = vrot.lane.b32.xlu0 %v1648, 40
        %v1664 = vpop.permute.xlu0 %1663
        %1665 = vrot.lane.b32.xlu0 %v1662, 40
        %v1666 = vpop.permute.xlu0 %1665
        %v1669 = vrot.slane %v1414, 6
        %v1670 = vrot.slane %v1416, 5
        %v1671 = vsel %vm1463, %v1670, %v1669
        %v1672 = vrot.slane %v1418, 4
        %v1673 = vsel %vm1466, %v1672, %v1671
        %v1674 = vrot.slane %v1420, 3
        %v1675 = vsel %vm1469, %v1674, %v1673
        %v1676 = vrot.slane %v1422, 2
        %v1677 = vsel %vm1472, %v1676, %v1675
        %v1678 = vrot.slane %v1424, 1
        %v1679 = vsel %vm1475, %v1678, %v1677
        %v1680 = vsel %vm1478, %v1426, %v1679
        %v1681 = vrot.slane %v1428, 7
        %v1682 = vsel %vm1481, %v1681, %v1680
        %v1683 = vrot.slane %v1430, 6
        %v1684 = vrot.slane %v1432, 5
        %v1685 = vsel %vm1463, %v1684, %v1683
        %v1686 = vrot.slane %v1434, 4
        %v1687 = vsel %vm1466, %v1686, %v1685
        %v1688 = vrot.slane %v1436, 3
        %v1689 = vsel %vm1469, %v1688, %v1687
        %v1690 = vrot.slane %v1438, 2
        %v1691 = vsel %vm1472, %v1690, %v1689
        %v1692 = vrot.slane %v1440, 1
        %v1693 = vsel %vm1475, %v1692, %v1691
        %v1694 = vsel %vm1478, %v1442, %v1693
        %v1695 = vrot.slane %v1444, 7
        %v1696 = vsel %vm1481, %v1695, %v1694
        %1697 = vrot.lane.b32.xlu0 %v1682, 48
        %v1698 = vpop.permute.xlu0 %1697
        %1699 = vrot.lane.b32.xlu0 %v1696, 48
        %v1700 = vpop.permute.xlu0 %1699
        %v1703 = vrot.slane %v1414, 7
        %v1704 = vrot.slane %v1416, 6
        %v1705 = vsel %vm1463, %v1704, %v1703
        %v1706 = vrot.slane %v1418, 5
        %v1707 = vsel %vm1466, %v1706, %v1705
        %v1708 = vrot.slane %v1420, 4
        %v1709 = vsel %vm1469, %v1708, %v1707
        %v1710 = vrot.slane %v1422, 3
        %v1711 = vsel %vm1472, %v1710, %v1709
        %v1712 = vrot.slane %v1424, 2
        %v1713 = vsel %vm1475, %v1712, %v1711
        %v1714 = vrot.slane %v1426, 1
        %v1715 = vsel %vm1478, %v1714, %v1713
        %v1716 = vsel %vm1481, %v1428, %v1715
        %v1717 = vrot.slane %v1430, 7
        %v1718 = vrot.slane %v1432, 6
        %v1719 = vsel %vm1463, %v1718, %v1717
        %v1720 = vrot.slane %v1434, 5
        %v1721 = vsel %vm1466, %v1720, %v1719
        %v1722 = vrot.slane %v1436, 4
        %v1723 = vsel %vm1469, %v1722, %v1721
        %v1724 = vrot.slane %v1438, 3
        %v1725 = vsel %vm1472, %v1724, %v1723
        %v1726 = vrot.slane %v1440, 2
        %v1727 = vsel %vm1475, %v1726, %v1725
        %v1728 = vrot.slane %v1442, 1
        %v1729 = vsel %vm1478, %v1728, %v1727
        %v1730 = vsel %vm1481, %v1444, %v1729
        %1731 = vrot.lane.b32.xlu0 %v1716, 56
        %v1732 = vpop.permute.xlu0 %1731
        %1733 = vrot.lane.b32.xlu0 %v1730, 56
        %v1734 = vpop.permute.xlu0 %1733
        %v1753 = vrot.slane %v1417, 7
        %v1754 = vsel %vm1463, %v1753, %v1415
        %v1755 = vrot.slane %v1419, 6
        %v1756 = vsel %vm1466, %v1755, %v1754
        %v1757 = vrot.slane %v1421, 5
        %v1758 = vsel %vm1469, %v1757, %v1756
        %v1759 = vrot.slane %v1423, 4
        %v1760 = vsel %vm1472, %v1759, %v1758
        %v1761 = vrot.slane %v1425, 3
        %v1762 = vsel %vm1475, %v1761, %v1760
        %v1763 = vrot.slane %v1427, 2
        %v1764 = vsel %vm1478, %v1763, %v1762
        %v1765 = vrot.slane %v1429, 1
        %v1766 = vsel %vm1481, %v1765, %v1764
        %v1767 = vrot.slane %v1433, 7
        %v1768 = vsel %vm1463, %v1767, %v1431
        %v1769 = vrot.slane %v1435, 6
        %v1770 = vsel %vm1466, %v1769, %v1768
        %v1771 = vrot.slane %v1437, 5
        %v1772 = vsel %vm1469, %v1771, %v1770
        %v1773 = vrot.slane %v1439, 4
        %v1774 = vsel %vm1472, %v1773, %v1772
        %v1775 = vrot.slane %v1441, 3
        %v1776 = vsel %vm1475, %v1775, %v1774
        %v1777 = vrot.slane %v1443, 2
        %v1778 = vsel %vm1478, %v1777, %v1776
        %v1779 = vrot.slane %v1445, 1
        %v1780 = vsel %vm1481, %v1779, %v1778
        %1781 = vrot.lane.b32.xlu0 %v1766, 64
        %v1782 = vpop.permute.xlu0 %1781
        %1783 = vrot.lane.b32.xlu0 %v1780, 64
        %v1784 = vpop.permute.xlu0 %1783
        %v1787 = vrot.slane %v1415, 1
        %v1788 = vsel %vm1463, %v1417, %v1787
        %v1789 = vrot.slane %v1419, 7
        %v1790 = vsel %vm1466, %v1789, %v1788
        %v1791 = vrot.slane %v1421, 6
        %v1792 = vsel %vm1469, %v1791, %v1790
        %v1793 = vrot.slane %v1423, 5
        %v1794 = vsel %vm1472, %v1793, %v1792
        %v1795 = vrot.slane %v1425, 4
        %v1796 = vsel %vm1475, %v1795, %v1794
        %v1797 = vrot.slane %v1427, 3
        %v1798 = vsel %vm1478, %v1797, %v1796
        %v1799 = vrot.slane %v1429, 2
        %v1800 = vsel %vm1481, %v1799, %v1798
        %v1801 = vrot.slane %v1431, 1
        %v1802 = vsel %vm1463, %v1433, %v1801
        %v1803 = vrot.slane %v1435, 7
        %v1804 = vsel %vm1466, %v1803, %v1802
        %v1805 = vrot.slane %v1437, 6
        %v1806 = vsel %vm1469, %v1805, %v1804
        %v1807 = vrot.slane %v1439, 5
        %v1808 = vsel %vm1472, %v1807, %v1806
        %v1809 = vrot.slane %v1441, 4
        %v1810 = vsel %vm1475, %v1809, %v1808
        %v1811 = vrot.slane %v1443, 3
        %v1812 = vsel %vm1478, %v1811, %v1810
        %v1813 = vrot.slane %v1445, 2
        %v1814 = vsel %vm1481, %v1813, %v1812
        %1815 = vrot.lane.b32.xlu0 %v1800, 72
        %v1816 = vpop.permute.xlu0 %1815
        %1817 = vrot.lane.b32.xlu0 %v1814, 72
        %v1818 = vpop.permute.xlu0 %1817
        %v1821 = vrot.slane %v1415, 2
        %v1822 = vrot.slane %v1417, 1
        %v1823 = vsel %vm1463, %v1822, %v1821
        %v1824 = vsel %vm1466, %v1419, %v1823
        %v1825 = vrot.slane %v1421, 7
        %v1826 = vsel %vm1469, %v1825, %v1824
        %v1827 = vrot.slane %v1423, 6
        %v1828 = vsel %vm1472, %v1827, %v1826
        %v1829 = vrot.slane %v1425, 5
        %v1830 = vsel %vm1475, %v1829, %v1828
        %v1831 = vrot.slane %v1427, 4
        %v1832 = vsel %vm1478, %v1831, %v1830
        %v1833 = vrot.slane %v1429, 3
        %v1834 = vsel %vm1481, %v1833, %v1832
        %v1835 = vrot.slane %v1431, 2
        %v1836 = vrot.slane %v1433, 1
        %v1837 = vsel %vm1463, %v1836, %v1835
        %v1838 = vsel %vm1466, %v1435, %v1837
        %v1839 = vrot.slane %v1437, 7
        %v1840 = vsel %vm1469, %v1839, %v1838
        %v1841 = vrot.slane %v1439, 6
        %v1842 = vsel %vm1472, %v1841, %v1840
        %v1843 = vrot.slane %v1441, 5
        %v1844 = vsel %vm1475, %v1843, %v1842
        %v1845 = vrot.slane %v1443, 4
        %v1846 = vsel %vm1478, %v1845, %v1844
        %v1847 = vrot.slane %v1445, 3
        %v1848 = vsel %vm1481, %v1847, %v1846
        %1849 = vrot.lane.b32.xlu0 %v1834, 80
        %v1850 = vpop.permute.xlu0 %1849
        %1851 = vrot.lane.b32.xlu0 %v1848, 80
        %v1852 = vpop.permute.xlu0 %1851
        %v1855 = vrot.slane %v1415, 3
        %v1856 = vrot.slane %v1417, 2
        %v1857 = vsel %vm1463, %v1856, %v1855
        %v1858 = vrot.slane %v1419, 1
        %v1859 = vsel %vm1466, %v1858, %v1857
        %v1860 = vsel %vm1469, %v1421, %v1859
        %v1861 = vrot.slane %v1423, 7
        %v1862 = vsel %vm1472, %v1861, %v1860
        %v1863 = vrot.slane %v1425, 6
        %v1864 = vsel %vm1475, %v1863, %v1862
        %v1865 = vrot.slane %v1427, 5
        %v1866 = vsel %vm1478, %v1865, %v1864
        %v1867 = vrot.slane %v1429, 4
        %v1868 = vsel %vm1481, %v1867, %v1866
        %v1869 = vrot.slane %v1431, 3
        %v1870 = vrot.slane %v1433, 2
        %v1871 = vsel %vm1463, %v1870, %v1869
        %v1872 = vrot.slane %v1435, 1
        %v1873 = vsel %vm1466, %v1872, %v1871
        %v1874 = vsel %vm1469, %v1437, %v1873
        %v1875 = vrot.slane %v1439, 7
        %v1876 = vsel %vm1472, %v1875, %v1874
        %v1877 = vrot.slane %v1441, 6
        %v1878 = vsel %vm1475, %v1877, %v1876
        %v1879 = vrot.slane %v1443, 5
        %v1880 = vsel %vm1478, %v1879, %v1878
        %v1881 = vrot.slane %v1445, 4
        %v1882 = vsel %vm1481, %v1881, %v1880
        %1883 = vrot.lane.b32.xlu0 %v1868, 88
        %v1884 = vpop.permute.xlu0 %1883
        %1885 = vrot.lane.b32.xlu0 %v1882, 88
        %v1886 = vpop.permute.xlu0 %1885
        %v1889 = vrot.slane %v1415, 4
        %v1890 = vrot.slane %v1417, 3
        %v1891 = vsel %vm1463, %v1890, %v1889
        %v1892 = vrot.slane %v1419, 2
        %v1893 = vsel %vm1466, %v1892, %v1891
        %v1894 = vrot.slane %v1421, 1
        %v1895 = vsel %vm1469, %v1894, %v1893
        %v1896 = vsel %vm1472, %v1423, %v1895
        %v1897 = vrot.slane %v1425, 7
        %v1898 = vsel %vm1475, %v1897, %v1896
        %v1899 = vrot.slane %v1427, 6
        %v1900 = vsel %vm1478, %v1899, %v1898
        %v1901 = vrot.slane %v1429, 5
        %v1902 = vsel %vm1481, %v1901, %v1900
        %v1903 = vrot.slane %v1431, 4
        %v1904 = vrot.slane %v1433, 3
        %v1905 = vsel %vm1463, %v1904, %v1903
        %v1906 = vrot.slane %v1435, 2
        %v1907 = vsel %vm1466, %v1906, %v1905
        %v1908 = vrot.slane %v1437, 1
        %v1909 = vsel %vm1469, %v1908, %v1907
        %v1910 = vsel %vm1472, %v1439, %v1909
        %v1911 = vrot.slane %v1441, 7
        %v1912 = vsel %vm1475, %v1911, %v1910
        %v1913 = vrot.slane %v1443, 6
        %v1914 = vsel %vm1478, %v1913, %v1912
        %v1915 = vrot.slane %v1445, 5
        %v1916 = vsel %vm1481, %v1915, %v1914
        %1917 = vrot.lane.b32.xlu0 %v1902, 96
        %v1918 = vpop.permute.xlu0 %1917
        %1919 = vrot.lane.b32.xlu0 %v1916, 96
        %v1920 = vpop.permute.xlu0 %1919
        %v1923 = vrot.slane %v1415, 5
        %v1924 = vrot.slane %v1417, 4
        %v1925 = vsel %vm1463, %v1924, %v1923
        %v1926 = vrot.slane %v1419, 3
        %v1927 = vsel %vm1466, %v1926, %v1925
        %v1928 = vrot.slane %v1421, 2
        %v1929 = vsel %vm1469, %v1928, %v1927
        %v1930 = vrot.slane %v1423, 1
        %v1931 = vsel %vm1472, %v1930, %v1929
        %v1932 = vsel %vm1475, %v1425, %v1931
        %v1933 = vrot.slane %v1427, 7
        %v1934 = vsel %vm1478, %v1933, %v1932
        %v1935 = vrot.slane %v1429, 6
        %v1936 = vsel %vm1481, %v1935, %v1934
        %v1937 = vrot.slane %v1431, 5
        %v1938 = vrot.slane %v1433, 4
        %v1939 = vsel %vm1463, %v1938, %v1937
        %v1940 = vrot.slane %v1435, 3
        %v1941 = vsel %vm1466, %v1940, %v1939
        %v1942 = vrot.slane %v1437, 2
        %v1943 = vsel %vm1469, %v1942, %v1941
        %v1944 = vrot.slane %v1439, 1
        %v1945 = vsel %vm1472, %v1944, %v1943
        %v1946 = vsel %vm1475, %v1441, %v1945
        %v1947 = vrot.slane %v1443, 7
        %v1948 = vsel %vm1478, %v1947, %v1946
        %v1949 = vrot.slane %v1445, 6
        %v1950 = vsel %vm1481, %v1949, %v1948
        %1951 = vrot.lane.b32.xlu0 %v1936, 104
        %v1952 = vpop.permute.xlu0 %1951
        %1953 = vrot.lane.b32.xlu0 %v1950, 104
        %v1954 = vpop.permute.xlu0 %1953
        %v1957 = vrot.slane %v1415, 6
        %v1958 = vrot.slane %v1417, 5
        %v1959 = vsel %vm1463, %v1958, %v1957
        %v1960 = vrot.slane %v1419, 4
        %v1961 = vsel %vm1466, %v1960, %v1959
        %v1962 = vrot.slane %v1421, 3
        %v1963 = vsel %vm1469, %v1962, %v1961
        %v1964 = vrot.slane %v1423, 2
        %v1965 = vsel %vm1472, %v1964, %v1963
        %v1966 = vrot.slane %v1425, 1
        %v1967 = vsel %vm1475, %v1966, %v1965
        %v1968 = vsel %vm1478, %v1427, %v1967
        %v1969 = vrot.slane %v1429, 7
        %v1970 = vsel %vm1481, %v1969, %v1968
        %v1971 = vrot.slane %v1431, 6
        %v1972 = vrot.slane %v1433, 5
        %v1973 = vsel %vm1463, %v1972, %v1971
        %v1974 = vrot.slane %v1435, 4
        %v1975 = vsel %vm1466, %v1974, %v1973
        %v1976 = vrot.slane %v1437, 3
        %v1977 = vsel %vm1469, %v1976, %v1975
        %v1978 = vrot.slane %v1439, 2
        %v1979 = vsel %vm1472, %v1978, %v1977
        %v1980 = vrot.slane %v1441, 1
        %v1981 = vsel %vm1475, %v1980, %v1979
        %v1982 = vsel %vm1478, %v1443, %v1981
        %v1983 = vrot.slane %v1445, 7
        %v1984 = vsel %vm1481, %v1983, %v1982
        %1985 = vrot.lane.b32.xlu0 %v1970, 112
        %v1986 = vpop.permute.xlu0 %1985
        %1987 = vrot.lane.b32.xlu0 %v1984, 112
        %v1988 = vpop.permute.xlu0 %1987
        %v1991 = vrot.slane %v1415, 7
        %v1992 = vrot.slane %v1417, 6
        %v1993 = vsel %vm1463, %v1992, %v1991
        %v1994 = vrot.slane %v1419, 5
        %v1995 = vsel %vm1466, %v1994, %v1993
        %v1996 = vrot.slane %v1421, 4
        %v1997 = vsel %vm1469, %v1996, %v1995
        %v1998 = vrot.slane %v1423, 3
        %v1999 = vsel %vm1472, %v1998, %v1997
        %v2000 = vrot.slane %v1425, 2
        %v2001 = vsel %vm1475, %v2000, %v1999
        %v2002 = vrot.slane %v1427, 1
        %v2003 = vsel %vm1478, %v2002, %v2001
        %v2004 = vsel %vm1481, %v1429, %v2003
        %v2005 = vrot.slane %v1431, 7
        %v2006 = vrot.slane %v1433, 6
        %v2007 = vsel %vm1463, %v2006, %v2005
        %v2008 = vrot.slane %v1435, 5
        %v2009 = vsel %vm1466, %v2008, %v2007
        %v2010 = vrot.slane %v1437, 4
        %v2011 = vsel %vm1469, %v2010, %v2009
        %v2012 = vrot.slane %v1439, 3
        %v2013 = vsel %vm1472, %v2012, %v2011
        %v2014 = vrot.slane %v1441, 2
        %v2015 = vsel %vm1475, %v2014, %v2013
        %v2016 = vrot.slane %v1443, 1
        %v2017 = vsel %vm1478, %v2016, %v2015
        %v2018 = vsel %vm1481, %v1445, %v2017
        %2019 = vrot.lane.b32.xlu0 %v2004, 120
        %v2020 = vpop.permute.xlu0 %2019
        %2021 = vrot.lane.b32.xlu0 %v2018, 120
        %v2022 = vpop.permute.xlu0 %2021
        %v2025 = vsel %vm1012, %v1482, %v1528
        %v2026 = vsel %vm1012, %v1496, %v1530
        %vm2027 = vcmask 130048
        %v2028 = vsel %vm2027, %v2025, %v1562
        %v2029 = vsel %vm2027, %v2026, %v1564
        %v2030 = vsel %vm1163, %v2028, %v1596
        %v2031 = vsel %vm1163, %v2029, %v1598
        %vm2032 = vcmask 261120
        %v2033 = vsel %vm2032, %v2030, %v1630
        %v2034 = vsel %vm2032, %v2031, %v1632
        %vm2035 = vcmask 326656
        %v2036 = vsel %vm2035, %v2033, %v1664
        %v2037 = vsel %vm2035, %v2034, %v1666
        %vm2038 = vcmask 392192
        %v2039 = vsel %vm2038, %v2036, %v1698
        %v2040 = vsel %vm2038, %v2037, %v1700
        %vm2041 = vcmask 457728
        %v2042 = vsel %vm2041, %v2039, %v1732
        %v2043 = vsel %vm2041, %v2040, %v1734
        %vm2044 = vcmask 523264
        %v2045 = vsel %vm2044, %v2042, %v1782
        %v2046 = vsel %vm2044, %v2043, %v1784
        %vm2047 = vcmask 588800
        %v2048 = vsel %vm2047, %v2045, %v1816
        %v2049 = vsel %vm2047, %v2046, %v1818
        %vm2050 = vcmask 654336
        %v2051 = vsel %vm2050, %v2048, %v1850
        %v2052 = vsel %vm2050, %v2049, %v1852
        %vm2053 = vcmask 719872
        %v2054 = vsel %vm2053, %v2051, %v1884
        %v2055 = vsel %vm2053, %v2052, %v1886
        %vm2056 = vcmask 785408
        %v2057 = vsel %vm2056, %v2054, %v1918
        %v2058 = vsel %vm2056, %v2055, %v1920
        %vm2059 = vcmask 850944
        %v2060 = vsel %vm2059, %v2057, %v1952
        %v2061 = vsel %vm2059, %v2058, %v1954
        %vm2062 = vcmask 916480
        %v2063 = vsel %vm2062, %v2060, %v1986
        %v2064 = vsel %vm2062, %v2061, %v1988
        %vm2065 = vcmask 982016
        %v2066 = vsel %vm2065, %v2063, %v2020
        %v2067 = vsel %vm2065, %v2064, %v2022
        %2068 = vst [vmem:[%s307] sm:$0xff] %v2066
        %2069 = vst [vmem:[%s307 + $0x8] sm:$0xff] %v2067
        %s2070 = sand.u32 %s161, 1
        %s2071 = scalar_lea.sflag [#allocation3], %s2070
        %s2072 = sand.u32 %s161, 1
        %s2073 = smul.addr %s2072, 16
        %s2074 = scalar_lea.vmem [#allocation2], %s2073
        // Predicated region
        $region37: #{tpu_custom_call.1} parent=35 // pred_check
          %p2075 = pneg %p171
        $region38: #{tpu_custom_call.1} parent=35 // pred_check_branch
          %2077 = sbr.rel (%p2075) target = $region40
        $region39: #{tpu_custom_call.1} parent=35 // pred_region
          %s2078 = smul.u32 2, %s23
          %s2080 = ssub.s32 256, 256
          %2081 = vsyncadd %s2071, %s2080
          %s2082 = smul.addr %s22, 2
          %s2083 = sadd.s32 %s2078, %s2082
          %s2084 = smul.addr %s2083, 128
          %s2085 = scalar_lea.hbm %s4, %s2084
          %s2086 = sshll.u32 %s2074, 4
          %s2087 = int_to_ptr.vmem [resolvable:$true] %s2086
          %2092 = dma.vmem_to_hbm [thread:$0]  %s2087, 256, %s2085, %s2071, 128, 128, 8
        $region40: #{tpu_custom_call.1} parent=35 // pred_fallthru
          _
      $region36: #{tpu_custom_call.1} parent=5 // pred_fallthru
        _
      %p2093 = scmp.le.s32.totalorder 2, %s13
      // Predicated region
      $region41: #{tpu_custom_call.1} parent=5 // pred_check
        %p2094 = pneg %p2093
      $region42: #{tpu_custom_call.1} parent=5 // pred_check_branch
        %2096 = sbr.rel (%p2094) target = $region44
      $region43: #{tpu_custom_call.1} parent=5 // pred_region
        %s2097 = ssub.s32 %s13, 2
        // Predicated region
        $region45: #{tpu_custom_call.1} parent=43 // pred_check
          %p2098 = pneg %p177
        $region46: #{tpu_custom_call.1} parent=43 // pred_check_branch
          %2100 = sbr.rel (%p2098) target = $region48
        $region47: #{tpu_custom_call.1} parent=43 // pred_region
          %s2101 = sand.u32 %s162, 1
          %s2102 = scalar_lea.sflag [#allocation3], %s2101
          %s2103 = sand.u32 %s162, 1
          %s2104 = smul.addr %s2103, 16
          %s2105 = scalar_lea.vmem [#allocation2], %s2104
          %2106 = dma.done %s2102, 256
        $region48: #{tpu_custom_call.1} parent=43 // pred_fallthru
          _
      $region44: #{tpu_custom_call.1} parent=5 // pred_fallthru
        _
    $region6: #{tpu_custom_call.1} parent=1 // loop_footer
      %s17 = sadd.s32 1, %s13
    $region7: #{tpu_custom_call.1} parent=1 // loop_footer_branch
      %12 = sbr.rel target = $region3
    $region8: #{tpu_custom_call.1} parent=1 // loop_exit
      _
    %2107 = vsyncpa [#allocation3], 1
    %s2108 = scalar_lea.sflag [#allocation3], 1
    %2109 = vsyncpa %s2108, 1

</llo_original>
